<compile_context>
chip_gen: v7x
topology: tpu7x:2x2x1
jax: 0.10.0
libtpu: 0.0.40
codegen_flags: <defaults>
</compile_context>

<pallas_src>
import jax
import jax.numpy as jnp
from jax import lax
from jax.experimental import pallas as pl
from jax.experimental.pallas import tpu as pltpu

D = 73   # pose feature dim (joints21 -> 73, per module docstring)
H = 32   # LSTM hidden size
B = 2    # batch
S = 8    # sequence length


def _gate_update(gates, c):
    """PyTorch LSTM cell update from pre-activation gates (order i, f, g, o).

    The g-gate pre-activations arrive pre-scaled by 2 (folded into the weights),
    so tanh(z) = 2*sigmoid(2z) - 1 comes out of the single full-width sigmoid.
    """
    sg = jax.nn.sigmoid(gates)               # one full-width (B, 4H) EUP pass
    i = sg[:, 0 * H:1 * H]
    f = sg[:, 1 * H:2 * H]
    g = 2.0 * sg[:, 2 * H:3 * H] - 1.0       # == tanh of the unscaled g gate (VPU fixup)
    o = sg[:, 3 * H:4 * H]
    c_new = f * c + i * g
    h_new = o * jnp.tanh(c_new)              # small (B, H) EUP op
    return h_new, c_new


def fused_ae_kernel(x_ref, ewih_ref, whh_ref, bias_ref, dwout_ref, y_ref, hs_sc):
    f32 = jnp.float32
    x = x_ref[...]                                   # (B, S, D)

    # Unpack packed parameters (lane-aligned slices, done once).
    whh = whh_ref[...]                               # (H, 12H)
    ewhh = whh[:, 0 * 4 * H:1 * 4 * H]               # encoder W_hh (g-scaled)
    dwhh = whh[:, 1 * 4 * H:2 * 4 * H]               # decoder W_hh (g-scaled), t=0 step
    wfused = whh[:, 2 * 4 * H:3 * 4 * H]             # W_out@W_ih + W_hh (g-scaled), t>=1

    bias = bias_ref[...]                             # (4, 4H)
    eb = bias[0:1, :]                                # encoder bias (1, 4H)
    # Hoisted (B, 4H) bias broadcasts: no per-step broadcast_in_dim in the loop.
    db_b = jnp.broadcast_to(bias[1:2, :], (B, 4 * H))
    bfused_b = jnp.broadcast_to(bias[2:3, :], (B, 4 * H))
    dbout = bias[3:4, :D]                            # (1, D) output-projection bias
    dwout = dwout_ref[...]                           # (H, D)

    # ---------------- encoder ----------------
    # Hoist the input matmul (+ bias) off the serial chain: one big matmul.
    xw = (jnp.dot(x.reshape(B * S, D), ewih_ref[...], preferred_element_type=f32)
          + eb).reshape(B, S, 4 * H)                 # (B, S, 4H)

    h = jnp.zeros((B, H), f32)
    c = jnp.zeros((B, H), f32)
    for t in range(S):
        gates = xw[:, t, :] + jnp.dot(h, ewhh, preferred_element_type=f32)
        h, c = _gate_update(gates, c)

    # ---------------- decoder ----------------
    # t = 0: decoder input is the zero frame -> plain W_hh / b path.
    gates = jnp.dot(h, dwhh, preferred_element_type=f32) + db_b
    h, c = _gate_update(gates, c)
    hs_sc[:, 0:1, :] = h.reshape(B, 1, H)
    # t >= 1: output projection folded into the recurrence (w_fused / b_fused).
    for t in range(1, S):
        gates = jnp.dot(h, wfused, preferred_element_type=f32) + bfused_b
        h, c = _gate_update(gates, c)
        hs_sc[:, t:t + 1, :] = h.reshape(B, 1, H)

    # One batched output projection + one full-block writeback.
    hs = hs_sc[...].reshape(B * S, H)
    y = jnp.dot(hs, dwout, preferred_element_type=f32) + dbout          # (B*S, D)
    y_ref[...] = y.reshape(B, S, D)


def lstm_body_ae_forward(x, p):
    """x: (B, S, D) float32. Returns (prediction, target) dicts like the PyTorch module."""
    f32 = jnp.float32

    def scale_g(a):
        # Fold the x2 of the one-sigmoid tanh trick into the g-gate columns.
        return a.at[..., 2 * H:3 * H].multiply(2.0)

    # Decoder fold precomputed OUTSIDE the kernel (plain JAX, runs once per call,
    # overlapped by XLA): w_fused = W_out@W_ih + W_hh, b_fused = b_out@W_ih + b.
    w_fused = jnp.dot(p["dec_wout"], p["dec_wih"]) + p["dec_whh"]        # (H, 4H)
    b_fused = jnp.dot(p["dec_bout"], p["dec_wih"]) + p["dec_b"]          # (1, 4H)

    # Pack parameters into 4 arrays -> 5 input DMAs total (incl. x).
    ewih = scale_g(p["enc_wih"])                                         # (D, 4H)
    whh_pack = jnp.concatenate(
        [scale_g(p["enc_whh"]), scale_g(p["dec_whh"]), scale_g(w_fused)],
        axis=1)                                                          # (H, 12H)
    dbout_pad = jnp.zeros((1, 4 * H), f32).at[:, :D].set(p["dec_bout"])
    bias_pack = jnp.concatenate(
        [scale_g(p["enc_b"]), scale_g(p["dec_b"]), scale_g(b_fused), dbout_pad],
        axis=0)                                                          # (4, 4H)

    vmem = pl.BlockSpec(memory_space=pltpu.MemorySpace.VMEM)
    preds = pl.pallas_call(
        fused_ae_kernel,
        out_shape=jax.ShapeDtypeStruct((B, S, D), f32),
        in_specs=[vmem] * 5,
        out_specs=vmem,
        scratch_shapes=[pltpu.VMEM((B, S, H), f32)],
    )(x, ewih, whh_pack, bias_pack, p["dec_wout"])
    return {"pose": preds}, {"pose": x}


# ---------------- pure-JAX reference (original, unfused math) ----------------
def _lstm_cell_ref(x_t, h, c, wih, whh, b):
    gates = jnp.dot(x_t, wih) + jnp.dot(h, whh) + b
    i = jax.nn.sigmoid(gates[:, 0 * H:1 * H])
    f = jax.nn.sigmoid(gates[:, 1 * H:2 * H])
    g = jnp.tanh(gates[:, 2 * H:3 * H])
    o = jax.nn.sigmoid(gates[:, 3 * H:4 * H])
    c_new = f * c + i * g
    h_new = o * jnp.tanh(c_new)
    return h_new, c_new


def ref_forward(x, p):
    xt = jnp.transpose(x, (1, 0, 2))

    def enc_step(carry, x_t):
        h, c = carry
        h, c = _lstm_cell_ref(x_t, h, c, p["enc_wih"], p["enc_whh"], p["enc_b"])
        return (h, c), None

    (h, c), _ = lax.scan(enc_step, (jnp.zeros((B, H), jnp.float32),
                                    jnp.zeros((B, H), jnp.float32)), xt)

    def dec_step(carry, _):
        h, c, out = carry
        h, c = _lstm_cell_ref(out, h, c, p["dec_wih"], p["dec_whh"], p["dec_b"])
        out = jnp.dot(h, p["dec_wout"]) + p["dec_bout"]
        return (h, c, out), out

    _, ys = lax.scan(dec_step, (h, c, jnp.zeros((B, D), jnp.float32)), None, length=S)
    return jnp.transpose(ys, (1, 0, 2))


if __name__ == "__main__":
    key = jax.random.PRNGKey(0)
    ks = jax.random.split(key, 10)

    def u(k, shape, scale):
        return jax.random.uniform(k, shape, jnp.float32, -scale, scale)

    s_lstm = 1.0 / (H ** 0.5)
    s_lin = 1.0 / (H ** 0.5)

    # PyTorch stores W_ih (4H, D), W_hh (4H, H), b_ih+b_hh (4H,), Linear W (D, H), b (D,).
    # We keep them pre-transposed for the kernel matmuls.
    params = {
        "enc_wih": u(ks[0], (D, 4 * H), s_lstm),
        "enc_whh": u(ks[1], (H, 4 * H), s_lstm),
        "enc_b": u(ks[2], (1, 4 * H), s_lstm) + u(ks[3], (1, 4 * H), s_lstm),
        "dec_wih": u(ks[4], (D, 4 * H), s_lstm),
        "dec_whh": u(ks[5], (H, 4 * H), s_lstm),
        "dec_b": u(ks[6], (1, 4 * H), s_lstm) + u(ks[7], (1, 4 * H), s_lstm),
        "dec_wout": u(ks[8], (H, D), s_lin),
        "dec_bout": u(ks[9], (1, D), s_lin),
    }

    x = jax.random.normal(jax.random.PRNGKey(42), (B, S, D), jnp.float32)

    prediction, target = jax.jit(lstm_body_ae_forward)(x, params)
    pred = jax.block_until_ready(prediction["pose"])

    ref = ref_forward(x, params)
    assert pred.shape == (B, S, D) and target["pose"].shape == (B, S, D)
    assert float(jnp.max(jnp.abs(pred - ref))) < 1e-4, "Pallas output mismatch vs reference"

    print("KERNEL_OK")
</pallas_src>

<mosaic_0001>
module attributes {stable_mosaic.version = 11 : i64} {
  func.func @fused_ae_kernel(%arg0: memref<2x8x73xf32, #tpu.memory_space<vmem>>, %arg1: memref<73x128xf32, #tpu.memory_space<vmem>>, %arg2: memref<32x384xf32, #tpu.memory_space<vmem>>, %arg3: memref<4x128xf32, #tpu.memory_space<vmem>>, %arg4: memref<32x73xf32, #tpu.memory_space<vmem>>, %arg5: memref<2x8x73xf32, #tpu.memory_space<vmem>>, %arg6: memref<2x8x32xf32, #tpu.memory_space<vmem>>) attributes {dimension_semantics = [], scalar_prefetch = 0 : i64, scratch_operands = 1 : i64, tpu.core_type = #tpu.core_type<tc>} {
    %c0 = arith.constant 0 : index
    %c0_0 = arith.constant 0 : index
    %c0_1 = arith.constant 0 : index
    %0 = vector.load %arg0[%c0, %c0_0, %c0_1] : memref<2x8x73xf32, #tpu.memory_space<vmem>>, vector<2x8x73xf32>
    %c0_2 = arith.constant 0 : index
    %c0_3 = arith.constant 0 : index
    %1 = vector.load %arg2[%c0_2, %c0_3] : memref<32x384xf32, #tpu.memory_space<vmem>>, vector<32x384xf32>
    %2 = vector.extract_strided_slice %1 {offsets = [0, 0], sizes = [32, 128], strides = [1, 1]} : vector<32x384xf32> to vector<32x128xf32>
    %3 = vector.extract_strided_slice %1 {offsets = [0, 128], sizes = [32, 128], strides = [1, 1]} : vector<32x384xf32> to vector<32x128xf32>
    %4 = vector.extract_strided_slice %1 {offsets = [0, 256], sizes = [32, 128], strides = [1, 1]} : vector<32x384xf32> to vector<32x128xf32>
    %c0_4 = arith.constant 0 : index
    %c0_5 = arith.constant 0 : index
    %5 = vector.load %arg3[%c0_4, %c0_5] : memref<4x128xf32, #tpu.memory_space<vmem>>, vector<4x128xf32>
    %6 = vector.extract_strided_slice %5 {offsets = [0, 0], sizes = [1, 128], strides = [1, 1]} : vector<4x128xf32> to vector<1x128xf32>
    %7 = vector.extract_strided_slice %5 {offsets = [1, 0], sizes = [1, 128], strides = [1, 1]} : vector<4x128xf32> to vector<1x128xf32>
    %8 = vector.shape_cast %7 : vector<1x128xf32> to vector<1x128xf32>
    %9 = vector.broadcast %8 : vector<1x128xf32> to vector<2x128xf32>
    %10 = vector.extract_strided_slice %5 {offsets = [2, 0], sizes = [1, 128], strides = [1, 1]} : vector<4x128xf32> to vector<1x128xf32>
    %11 = vector.shape_cast %10 : vector<1x128xf32> to vector<1x128xf32>
    %12 = vector.broadcast %11 : vector<1x128xf32> to vector<2x128xf32>
    %13 = vector.extract_strided_slice %5 {offsets = [3, 0], sizes = [1, 73], strides = [1, 1]} : vector<4x128xf32> to vector<1x73xf32>
    %c0_6 = arith.constant 0 : index
    %c0_7 = arith.constant 0 : index
    %14 = vector.load %arg4[%c0_6, %c0_7] : memref<32x73xf32, #tpu.memory_space<vmem>>, vector<32x73xf32>
    %15 = vector.shape_cast %0 : vector<2x8x73xf32> to vector<16x73xf32>
    %c0_8 = arith.constant 0 : index
    %c0_9 = arith.constant 0 : index
    %16 = vector.load %arg1[%c0_8, %c0_9] : memref<73x128xf32, #tpu.memory_space<vmem>>, vector<73x128xf32>
    %cst = arith.constant dense<0.000000e+00> : vector<16x128xf32>
    %17 = tpu.matmul %15, %16, %cst {dimension_numbers = #tpu.dot_dimension_numbers<[1], [0], [0], [1], [0, 0, 1, 1], [], []>} : vector<16x73xf32>, vector<73x128xf32>, vector<16x128xf32> -> vector<16x128xf32>
    %18 = vector.broadcast %6 : vector<1x128xf32> to vector<16x128xf32>
    %19 = arith.addf %17, %18 : vector<16x128xf32>
    %20 = vector.shape_cast %19 : vector<16x128xf32> to vector<2x8x128xf32>
    %cst_10 = arith.constant 0.000000e+00 : f32
    %21 = vector.broadcast %cst_10 : f32 to vector<2x32xf32>
    %cst_11 = arith.constant 0.000000e+00 : f32
    %22 = vector.broadcast %cst_11 : f32 to vector<2x32xf32>
    %23 = vector.extract_strided_slice %20 {offsets = [0, 0, 0], sizes = [2, 1, 128], strides = [1, 1, 1]} : vector<2x8x128xf32> to vector<2x1x128xf32>
    %24 = vector.shape_cast %23 : vector<2x1x128xf32> to vector<2x128xf32>
    %cst_12 = arith.constant dense<0.000000e+00> : vector<2x128xf32>
    %25 = tpu.matmul %21, %2, %cst_12 {dimension_numbers = #tpu.dot_dimension_numbers<[1], [0], [0], [1], [0, 0, 1, 1], [], []>} : vector<2x32xf32>, vector<32x128xf32>, vector<2x128xf32> -> vector<2x128xf32>
    %26 = arith.addf %24, %25 : vector<2x128xf32>
    %27 = arith.negf %26 : vector<2x128xf32>
    %28 = math.exp %27 : vector<2x128xf32>
    %cst_13 = arith.constant 1.000000e+00 : f32
    %29 = vector.broadcast %cst_13 : f32 to vector<2x128xf32>
    %30 = arith.addf %29, %28 : vector<2x128xf32>
    %31 = arith.divf %29, %30 : vector<2x128xf32>
    %32 = vector.extract_strided_slice %31 {offsets = [0, 0], sizes = [2, 32], strides = [1, 1]} : vector<2x128xf32> to vector<2x32xf32>
    %33 = vector.extract_strided_slice %31 {offsets = [0, 32], sizes = [2, 32], strides = [1, 1]} : vector<2x128xf32> to vector<2x32xf32>
    %34 = vector.extract_strided_slice %31 {offsets = [0, 64], sizes = [2, 32], strides = [1, 1]} : vector<2x128xf32> to vector<2x32xf32>
    %cst_14 = arith.constant 2.000000e+00 : f32
    %35 = vector.broadcast %cst_14 : f32 to vector<2x32xf32>
    %36 = arith.mulf %35, %34 : vector<2x32xf32>
    %cst_15 = arith.constant 1.000000e+00 : f32
    %37 = vector.broadcast %cst_15 : f32 to vector<2x32xf32>
    %38 = arith.subf %36, %37 : vector<2x32xf32>
    %39 = vector.extract_strided_slice %31 {offsets = [0, 96], sizes = [2, 32], strides = [1, 1]} : vector<2x128xf32> to vector<2x32xf32>
    %40 = arith.mulf %33, %22 : vector<2x32xf32>
    %41 = arith.mulf %32, %38 : vector<2x32xf32>
    %42 = arith.addf %40, %41 : vector<2x32xf32>
    %43 = math.tanh %42 : vector<2x32xf32>
    %44 = arith.mulf %39, %43 : vector<2x32xf32>
    %45 = vector.extract_strided_slice %20 {offsets = [0, 1, 0], sizes = [2, 1, 128], strides = [1, 1, 1]} : vector<2x8x128xf32> to vector<2x1x128xf32>
    %46 = vector.shape_cast %45 : vector<2x1x128xf32> to vector<2x128xf32>
    %cst_16 = arith.constant dense<0.000000e+00> : vector<2x128xf32>
    %47 = tpu.matmul %44, %2, %cst_16 {dimension_numbers = #tpu.dot_dimension_numbers<[1], [0], [0], [1], [0, 0, 1, 1], [], []>} : vector<2x32xf32>, vector<32x128xf32>, vector<2x128xf32> -> vector<2x128xf32>
    %48 = arith.addf %46, %47 : vector<2x128xf32>
    %49 = arith.negf %48 : vector<2x128xf32>
    %50 = math.exp %49 : vector<2x128xf32>
    %cst_17 = arith.constant 1.000000e+00 : f32
    %51 = vector.broadcast %cst_17 : f32 to vector<2x128xf32>
    %52 = arith.addf %51, %50 : vector<2x128xf32>
    %53 = arith.divf %51, %52 : vector<2x128xf32>
    %54 = vector.extract_strided_slice %53 {offsets = [0, 0], sizes = [2, 32], strides = [1, 1]} : vector<2x128xf32> to vector<2x32xf32>
    %55 = vector.extract_strided_slice %53 {offsets = [0, 32], sizes = [2, 32], strides = [1, 1]} : vector<2x128xf32> to vector<2x32xf32>
    %56 = vector.extract_strided_slice %53 {offsets = [0, 64], sizes = [2, 32], strides = [1, 1]} : vector<2x128xf32> to vector<2x32xf32>
    %cst_18 = arith.constant 2.000000e+00 : f32
    %57 = vector.broadcast %cst_18 : f32 to vector<2x32xf32>
    %58 = arith.mulf %57, %56 : vector<2x32xf32>
    %cst_19 = arith.constant 1.000000e+00 : f32
    %59 = vector.broadcast %cst_19 : f32 to vector<2x32xf32>
    %60 = arith.subf %58, %59 : vector<2x32xf32>
    %61 = vector.extract_strided_slice %53 {offsets = [0, 96], sizes = [2, 32], strides = [1, 1]} : vector<2x128xf32> to vector<2x32xf32>
    %62 = arith.mulf %55, %42 : vector<2x32xf32>
    %63 = arith.mulf %54, %60 : vector<2x32xf32>
    %64 = arith.addf %62, %63 : vector<2x32xf32>
    %65 = math.tanh %64 : vector<2x32xf32>
    %66 = arith.mulf %61, %65 : vector<2x32xf32>
    %67 = vector.extract_strided_slice %20 {offsets = [0, 2, 0], sizes = [2, 1, 128], strides = [1, 1, 1]} : vector<2x8x128xf32> to vector<2x1x128xf32>
    %68 = vector.shape_cast %67 : vector<2x1x128xf32> to vector<2x128xf32>
    %cst_20 = arith.constant dense<0.000000e+00> : vector<2x128xf32>
    %69 = tpu.matmul %66, %2, %cst_20 {dimension_numbers = #tpu.dot_dimension_numbers<[1], [0], [0], [1], [0, 0, 1, 1], [], []>} : vector<2x32xf32>, vector<32x128xf32>, vector<2x128xf32> -> vector<2x128xf32>
    %70 = arith.addf %68, %69 : vector<2x128xf32>
    %71 = arith.negf %70 : vector<2x128xf32>
    %72 = math.exp %71 : vector<2x128xf32>
    %cst_21 = arith.constant 1.000000e+00 : f32
    %73 = vector.broadcast %cst_21 : f32 to vector<2x128xf32>
    %74 = arith.addf %73, %72 : vector<2x128xf32>
    %75 = arith.divf %73, %74 : vector<2x128xf32>
    %76 = vector.extract_strided_slice %75 {offsets = [0, 0], sizes = [2, 32], strides = [1, 1]} : vector<2x128xf32> to vector<2x32xf32>
    %77 = vector.extract_strided_slice %75 {offsets = [0, 32], sizes = [2, 32], strides = [1, 1]} : vector<2x128xf32> to vector<2x32xf32>
    %78 = vector.extract_strided_slice %75 {offsets = [0, 64], sizes = [2, 32], strides = [1, 1]} : vector<2x128xf32> to vector<2x32xf32>
    %cst_22 = arith.constant 2.000000e+00 : f32
    %79 = vector.broadcast %cst_22 : f32 to vector<2x32xf32>
    %80 = arith.mulf %79, %78 : vector<2x32xf32>
    %cst_23 = arith.constant 1.000000e+00 : f32
    %81 = vector.broadcast %cst_23 : f32 to vector<2x32xf32>
    %82 = arith.subf %80, %81 : vector<2x32xf32>
    %83 = vector.extract_strided_slice %75 {offsets = [0, 96], sizes = [2, 32], strides = [1, 1]} : vector<2x128xf32> to vector<2x32xf32>
    %84 = arith.mulf %77, %64 : vector<2x32xf32>
    %85 = arith.mulf %76, %82 : vector<2x32xf32>
    %86 = arith.addf %84, %85 : vector<2x32xf32>
    %87 = math.tanh %86 : vector<2x32xf32>
    %88 = arith.mulf %83, %87 : vector<2x32xf32>
    %89 = vector.extract_strided_slice %20 {offsets = [0, 3, 0], sizes = [2, 1, 128], strides = [1, 1, 1]} : vector<2x8x128xf32> to vector<2x1x128xf32>
    %90 = vector.shape_cast %89 : vector<2x1x128xf32> to vector<2x128xf32>
    %cst_24 = arith.constant dense<0.000000e+00> : vector<2x128xf32>
    %91 = tpu.matmul %88, %2, %cst_24 {dimension_numbers = #tpu.dot_dimension_numbers<[1], [0], [0], [1], [0, 0, 1, 1], [], []>} : vector<2x32xf32>, vector<32x128xf32>, vector<2x128xf32> -> vector<2x128xf32>
    %92 = arith.addf %90, %91 : vector<2x128xf32>
    %93 = arith.negf %92 : vector<2x128xf32>
    %94 = math.exp %93 : vector<2x128xf32>
    %cst_25 = arith.constant 1.000000e+00 : f32
    %95 = vector.broadcast %cst_25 : f32 to vector<2x128xf32>
    %96 = arith.addf %95, %94 : vector<2x128xf32>
    %97 = arith.divf %95, %96 : vector<2x128xf32>
    %98 = vector.extract_strided_slice %97 {offsets = [0, 0], sizes = [2, 32], strides = [1, 1]} : vector<2x128xf32> to vector<2x32xf32>
    %99 = vector.extract_strided_slice %97 {offsets = [0, 32], sizes = [2, 32], strides = [1, 1]} : vector<2x128xf32> to vector<2x32xf32>
    %100 = vector.extract_strided_slice %97 {offsets = [0, 64], sizes = [2, 32], strides = [1, 1]} : vector<2x128xf32> to vector<2x32xf32>
    %cst_26 = arith.constant 2.000000e+00 : f32
    %101 = vector.broadcast %cst_26 : f32 to vector<2x32xf32>
    %102 = arith.mulf %101, %100 : vector<2x32xf32>
    %cst_27 = arith.constant 1.000000e+00 : f32
    %103 = vector.broadcast %cst_27 : f32 to vector<2x32xf32>
    %104 = arith.subf %102, %103 : vector<2x32xf32>
    %105 = vector.extract_strided_slice %97 {offsets = [0, 96], sizes = [2, 32], strides = [1, 1]} : vector<2x128xf32> to vector<2x32xf32>
    %106 = arith.mulf %99, %86 : vector<2x32xf32>
    %107 = arith.mulf %98, %104 : vector<2x32xf32>
    %108 = arith.addf %106, %107 : vector<2x32xf32>
    %109 = math.tanh %108 : vector<2x32xf32>
    %110 = arith.mulf %105, %109 : vector<2x32xf32>
    %111 = vector.extract_strided_slice %20 {offsets = [0, 4, 0], sizes = [2, 1, 128], strides = [1, 1, 1]} : vector<2x8x128xf32> to vector<2x1x128xf32>
    %112 = vector.shape_cast %111 : vector<2x1x128xf32> to vector<2x128xf32>
    %cst_28 = arith.constant dense<0.000000e+00> : vector<2x128xf32>
    %113 = tpu.matmul %110, %2, %cst_28 {dimension_numbers = #tpu.dot_dimension_numbers<[1], [0], [0], [1], [0, 0, 1, 1], [], []>} : vector<2x32xf32>, vector<32x128xf32>, vector<2x128xf32> -> vector<2x128xf32>
    %114 = arith.addf %112, %113 : vector<2x128xf32>
    %115 = arith.negf %114 : vector<2x128xf32>
    %116 = math.exp %115 : vector<2x128xf32>
    %cst_29 = arith.constant 1.000000e+00 : f32
    %117 = vector.broadcast %cst_29 : f32 to vector<2x128xf32>
    %118 = arith.addf %117, %116 : vector<2x128xf32>
    %119 = arith.divf %117, %118 : vector<2x128xf32>
    %120 = vector.extract_strided_slice %119 {offsets = [0, 0], sizes = [2, 32], strides = [1, 1]} : vector<2x128xf32> to vector<2x32xf32>
    %121 = vector.extract_strided_slice %119 {offsets = [0, 32], sizes = [2, 32], strides = [1, 1]} : vector<2x128xf32> to vector<2x32xf32>
    %122 = vector.extract_strided_slice %119 {offsets = [0, 64], sizes = [2, 32], strides = [1, 1]} : vector<2x128xf32> to vector<2x32xf32>
    %cst_30 = arith.constant 2.000000e+00 : f32
    %123 = vector.broadcast %cst_30 : f32 to vector<2x32xf32>
    %124 = arith.mulf %123, %122 : vector<2x32xf32>
    %cst_31 = arith.constant 1.000000e+00 : f32
    %125 = vector.broadcast %cst_31 : f32 to vector<2x32xf32>
    %126 = arith.subf %124, %125 : vector<2x32xf32>
    %127 = vector.extract_strided_slice %119 {offsets = [0, 96], sizes = [2, 32], strides = [1, 1]} : vector<2x128xf32> to vector<2x32xf32>
    %128 = arith.mulf %121, %108 : vector<2x32xf32>
    %129 = arith.mulf %120, %126 : vector<2x32xf32>
    %130 = arith.addf %128, %129 : vector<2x32xf32>
    %131 = math.tanh %130 : vector<2x32xf32>
    %132 = arith.mulf %127, %131 : vector<2x32xf32>
    %133 = vector.extract_strided_slice %20 {offsets = [0, 5, 0], sizes = [2, 1, 128], strides = [1, 1, 1]} : vector<2x8x128xf32> to vector<2x1x128xf32>
    %134 = vector.shape_cast %133 : vector<2x1x128xf32> to vector<2x128xf32>
    %cst_32 = arith.constant dense<0.000000e+00> : vector<2x128xf32>
    %135 = tpu.matmul %132, %2, %cst_32 {dimension_numbers = #tpu.dot_dimension_numbers<[1], [0], [0], [1], [0, 0, 1, 1], [], []>} : vector<2x32xf32>, vector<32x128xf32>, vector<2x128xf32> -> vector<2x128xf32>
    %136 = arith.addf %134, %135 : vector<2x128xf32>
    %137 = arith.negf %136 : vector<2x128xf32>
    %138 = math.exp %137 : vector<2x128xf32>
    %cst_33 = arith.constant 1.000000e+00 : f32
    %139 = vector.broadcast %cst_33 : f32 to vector<2x128xf32>
    %140 = arith.addf %139, %138 : vector<2x128xf32>
    %141 = arith.divf %139, %140 : vector<2x128xf32>
    %142 = vector.extract_strided_slice %141 {offsets = [0, 0], sizes = [2, 32], strides = [1, 1]} : vector<2x128xf32> to vector<2x32xf32>
    %143 = vector.extract_strided_slice %141 {offsets = [0, 32], sizes = [2, 32], strides = [1, 1]} : vector<2x128xf32> to vector<2x32xf32>
    %144 = vector.extract_strided_slice %141 {offsets = [0, 64], sizes = [2, 32], strides = [1, 1]} : vector<2x128xf32> to vector<2x32xf32>
    %cst_34 = arith.constant 2.000000e+00 : f32
    %145 = vector.broadcast %cst_34 : f32 to vector<2x32xf32>
    %146 = arith.mulf %145, %144 : vector<2x32xf32>
    %cst_35 = arith.constant 1.000000e+00 : f32
    %147 = vector.broadcast %cst_35 : f32 to vector<2x32xf32>
    %148 = arith.subf %146, %147 : vector<2x32xf32>
    %149 = vector.extract_strided_slice %141 {offsets = [0, 96], sizes = [2, 32], strides = [1, 1]} : vector<2x128xf32> to vector<2x32xf32>
    %150 = arith.mulf %143, %130 : vector<2x32xf32>
    %151 = arith.mulf %142, %148 : vector<2x32xf32>
    %152 = arith.addf %150, %151 : vector<2x32xf32>
    %153 = math.tanh %152 : vector<2x32xf32>
    %154 = arith.mulf %149, %153 : vector<2x32xf32>
    %155 = vector.extract_strided_slice %20 {offsets = [0, 6, 0], sizes = [2, 1, 128], strides = [1, 1, 1]} : vector<2x8x128xf32> to vector<2x1x128xf32>
    %156 = vector.shape_cast %155 : vector<2x1x128xf32> to vector<2x128xf32>
    %cst_36 = arith.constant dense<0.000000e+00> : vector<2x128xf32>
    %157 = tpu.matmul %154, %2, %cst_36 {dimension_numbers = #tpu.dot_dimension_numbers<[1], [0], [0], [1], [0, 0, 1, 1], [], []>} : vector<2x32xf32>, vector<32x128xf32>, vector<2x128xf32> -> vector<2x128xf32>
    %158 = arith.addf %156, %157 : vector<2x128xf32>
    %159 = arith.negf %158 : vector<2x128xf32>
    %160 = math.exp %159 : vector<2x128xf32>
    %cst_37 = arith.constant 1.000000e+00 : f32
    %161 = vector.broadcast %cst_37 : f32 to vector<2x128xf32>
    %162 = arith.addf %161, %160 : vector<2x128xf32>
    %163 = arith.divf %161, %162 : vector<2x128xf32>
    %164 = vector.extract_strided_slice %163 {offsets = [0, 0], sizes = [2, 32], strides = [1, 1]} : vector<2x128xf32> to vector<2x32xf32>
    %165 = vector.extract_strided_slice %163 {offsets = [0, 32], sizes = [2, 32], strides = [1, 1]} : vector<2x128xf32> to vector<2x32xf32>
    %166 = vector.extract_strided_slice %163 {offsets = [0, 64], sizes = [2, 32], strides = [1, 1]} : vector<2x128xf32> to vector<2x32xf32>
    %cst_38 = arith.constant 2.000000e+00 : f32
    %167 = vector.broadcast %cst_38 : f32 to vector<2x32xf32>
    %168 = arith.mulf %167, %166 : vector<2x32xf32>
    %cst_39 = arith.constant 1.000000e+00 : f32
    %169 = vector.broadcast %cst_39 : f32 to vector<2x32xf32>
    %170 = arith.subf %168, %169 : vector<2x32xf32>
    %171 = vector.extract_strided_slice %163 {offsets = [0, 96], sizes = [2, 32], strides = [1, 1]} : vector<2x128xf32> to vector<2x32xf32>
    %172 = arith.mulf %165, %152 : vector<2x32xf32>
    %173 = arith.mulf %164, %170 : vector<2x32xf32>
    %174 = arith.addf %172, %173 : vector<2x32xf32>
    %175 = math.tanh %174 : vector<2x32xf32>
    %176 = arith.mulf %171, %175 : vector<2x32xf32>
    %177 = vector.extract_strided_slice %20 {offsets = [0, 7, 0], sizes = [2, 1, 128], strides = [1, 1, 1]} : vector<2x8x128xf32> to vector<2x1x128xf32>
    %178 = vector.shape_cast %177 : vector<2x1x128xf32> to vector<2x128xf32>
    %cst_40 = arith.constant dense<0.000000e+00> : vector<2x128xf32>
    %179 = tpu.matmul %176, %2, %cst_40 {dimension_numbers = #tpu.dot_dimension_numbers<[1], [0], [0], [1], [0, 0, 1, 1], [], []>} : vector<2x32xf32>, vector<32x128xf32>, vector<2x128xf32> -> vector<2x128xf32>
    %180 = arith.addf %178, %179 : vector<2x128xf32>
    %181 = arith.negf %180 : vector<2x128xf32>
    %182 = math.exp %181 : vector<2x128xf32>
    %cst_41 = arith.constant 1.000000e+00 : f32
    %183 = vector.broadcast %cst_41 : f32 to vector<2x128xf32>
    %184 = arith.addf %183, %182 : vector<2x128xf32>
    %185 = arith.divf %183, %184 : vector<2x128xf32>
    %186 = vector.extract_strided_slice %185 {offsets = [0, 0], sizes = [2, 32], strides = [1, 1]} : vector<2x128xf32> to vector<2x32xf32>
    %187 = vector.extract_strided_slice %185 {offsets = [0, 32], sizes = [2, 32], strides = [1, 1]} : vector<2x128xf32> to vector<2x32xf32>
    %188 = vector.extract_strided_slice %185 {offsets = [0, 64], sizes = [2, 32], strides = [1, 1]} : vector<2x128xf32> to vector<2x32xf32>
    %cst_42 = arith.constant 2.000000e+00 : f32
    %189 = vector.broadcast %cst_42 : f32 to vector<2x32xf32>
    %190 = arith.mulf %189, %188 : vector<2x32xf32>
    %cst_43 = arith.constant 1.000000e+00 : f32
    %191 = vector.broadcast %cst_43 : f32 to vector<2x32xf32>
    %192 = arith.subf %190, %191 : vector<2x32xf32>
    %193 = vector.extract_strided_slice %185 {offsets = [0, 96], sizes = [2, 32], strides = [1, 1]} : vector<2x128xf32> to vector<2x32xf32>
    %194 = arith.mulf %187, %174 : vector<2x32xf32>
    %195 = arith.mulf %186, %192 : vector<2x32xf32>
    %196 = arith.addf %194, %195 : vector<2x32xf32>
    %197 = math.tanh %196 : vector<2x32xf32>
    %198 = arith.mulf %193, %197 : vector<2x32xf32>
    %cst_44 = arith.constant dense<0.000000e+00> : vector<2x128xf32>
    %199 = tpu.matmul %198, %3, %cst_44 {dimension_numbers = #tpu.dot_dimension_numbers<[1], [0], [0], [1], [0, 0, 1, 1], [], []>} : vector<2x32xf32>, vector<32x128xf32>, vector<2x128xf32> -> vector<2x128xf32>
    %200 = arith.addf %199, %9 : vector<2x128xf32>
    %201 = arith.negf %200 : vector<2x128xf32>
    %202 = math.exp %201 : vector<2x128xf32>
    %cst_45 = arith.constant 1.000000e+00 : f32
    %203 = vector.broadcast %cst_45 : f32 to vector<2x128xf32>
    %204 = arith.addf %203, %202 : vector<2x128xf32>
    %205 = arith.divf %203, %204 : vector<2x128xf32>
    %206 = vector.extract_strided_slice %205 {offsets = [0, 0], sizes = [2, 32], strides = [1, 1]} : vector<2x128xf32> to vector<2x32xf32>
    %207 = vector.extract_strided_slice %205 {offsets = [0, 32], sizes = [2, 32], strides = [1, 1]} : vector<2x128xf32> to vector<2x32xf32>
    %208 = vector.extract_strided_slice %205 {offsets = [0, 64], sizes = [2, 32], strides = [1, 1]} : vector<2x128xf32> to vector<2x32xf32>
    %cst_46 = arith.constant 2.000000e+00 : f32
    %209 = vector.broadcast %cst_46 : f32 to vector<2x32xf32>
    %210 = arith.mulf %209, %208 : vector<2x32xf32>
    %cst_47 = arith.constant 1.000000e+00 : f32
    %211 = vector.broadcast %cst_47 : f32 to vector<2x32xf32>
    %212 = arith.subf %210, %211 : vector<2x32xf32>
    %213 = vector.extract_strided_slice %205 {offsets = [0, 96], sizes = [2, 32], strides = [1, 1]} : vector<2x128xf32> to vector<2x32xf32>
    %214 = arith.mulf %207, %196 : vector<2x32xf32>
    %215 = arith.mulf %206, %212 : vector<2x32xf32>
    %216 = arith.addf %214, %215 : vector<2x32xf32>
    %217 = math.tanh %216 : vector<2x32xf32>
    %218 = arith.mulf %213, %217 : vector<2x32xf32>
    %219 = vector.shape_cast %218 : vector<2x32xf32> to vector<2x1x32xf32>
    %c0_48 = arith.constant 0 : index
    %c0_49 = arith.constant 0 : index
    %c0_50 = arith.constant 0 : index
    %220 = vector.load %arg6[%c0_48, %c0_49, %c0_50] : memref<2x8x32xf32, #tpu.memory_space<vmem>>, vector<2x1x32xf32>
    tpu.vector_store %arg6[%c0_48, %c0_49, %c0_50], %219 {strides = array<i32>} : memref<2x8x32xf32, #tpu.memory_space<vmem>>, vector<2x1x32xf32>,
    %cst_51 = arith.constant dense<0.000000e+00> : vector<2x128xf32>
    %221 = tpu.matmul %218, %4, %cst_51 {dimension_numbers = #tpu.dot_dimension_numbers<[1], [0], [0], [1], [0, 0, 1, 1], [], []>} : vector<2x32xf32>, vector<32x128xf32>, vector<2x128xf32> -> vector<2x128xf32>
    %222 = arith.addf %221, %12 : vector<2x128xf32>
    %223 = arith.negf %222 : vector<2x128xf32>
    %224 = math.exp %223 : vector<2x128xf32>
    %cst_52 = arith.constant 1.000000e+00 : f32
    %225 = vector.broadcast %cst_52 : f32 to vector<2x128xf32>
    %226 = arith.addf %225, %224 : vector<2x128xf32>
    %227 = arith.divf %225, %226 : vector<2x128xf32>
    %228 = vector.extract_strided_slice %227 {offsets = [0, 0], sizes = [2, 32], strides = [1, 1]} : vector<2x128xf32> to vector<2x32xf32>
    %229 = vector.extract_strided_slice %227 {offsets = [0, 32], sizes = [2, 32], strides = [1, 1]} : vector<2x128xf32> to vector<2x32xf32>
    %230 = vector.extract_strided_slice %227 {offsets = [0, 64], sizes = [2, 32], strides = [1, 1]} : vector<2x128xf32> to vector<2x32xf32>
    %cst_53 = arith.constant 2.000000e+00 : f32
    %231 = vector.broadcast %cst_53 : f32 to vector<2x32xf32>
    %232 = arith.mulf %231, %230 : vector<2x32xf32>
    %cst_54 = arith.constant 1.000000e+00 : f32
    %233 = vector.broadcast %cst_54 : f32 to vector<2x32xf32>
    %234 = arith.subf %232, %233 : vector<2x32xf32>
    %235 = vector.extract_strided_slice %227 {offsets = [0, 96], sizes = [2, 32], strides = [1, 1]} : vector<2x128xf32> to vector<2x32xf32>
    %236 = arith.mulf %229, %216 : vector<2x32xf32>
    %237 = arith.mulf %228, %234 : vector<2x32xf32>
    %238 = arith.addf %236, %237 : vector<2x32xf32>
    %239 = math.tanh %238 : vector<2x32xf32>
    %240 = arith.mulf %235, %239 : vector<2x32xf32>
    %241 = vector.shape_cast %240 : vector<2x32xf32> to vector<2x1x32xf32>
    %c0_55 = arith.constant 0 : index
    %c1 = arith.constant 1 : index
    %c0_56 = arith.constant 0 : index
    %242 = vector.load %arg6[%c0_55, %c1, %c0_56] : memref<2x8x32xf32, #tpu.memory_space<vmem>>, vector<2x1x32xf32>
    tpu.vector_store %arg6[%c0_55, %c1, %c0_56], %241 {strides = array<i32>} : memref<2x8x32xf32, #tpu.memory_space<vmem>>, vector<2x1x32xf32>,
    %cst_57 = arith.constant dense<0.000000e+00> : vector<2x128xf32>
    %243 = tpu.matmul %240, %4, %cst_57 {dimension_numbers = #tpu.dot_dimension_numbers<[1], [0], [0], [1], [0, 0, 1, 1], [], []>} : vector<2x32xf32>, vector<32x128xf32>, vector<2x128xf32> -> vector<2x128xf32>
    %244 = arith.addf %243, %12 : vector<2x128xf32>
    %245 = arith.negf %244 : vector<2x128xf32>
    %246 = math.exp %245 : vector<2x128xf32>
    %cst_58 = arith.constant 1.000000e+00 : f32
    %247 = vector.broadcast %cst_58 : f32 to vector<2x128xf32>
    %248 = arith.addf %247, %246 : vector<2x128xf32>
    %249 = arith.divf %247, %248 : vector<2x128xf32>
    %250 = vector.extract_strided_slice %249 {offsets = [0, 0], sizes = [2, 32], strides = [1, 1]} : vector<2x128xf32> to vector<2x32xf32>
    %251 = vector.extract_strided_slice %249 {offsets = [0, 32], sizes = [2, 32], strides = [1, 1]} : vector<2x128xf32> to vector<2x32xf32>
    %252 = vector.extract_strided_slice %249 {offsets = [0, 64], sizes = [2, 32], strides = [1, 1]} : vector<2x128xf32> to vector<2x32xf32>
    %cst_59 = arith.constant 2.000000e+00 : f32
    %253 = vector.broadcast %cst_59 : f32 to vector<2x32xf32>
    %254 = arith.mulf %253, %252 : vector<2x32xf32>
    %cst_60 = arith.constant 1.000000e+00 : f32
    %255 = vector.broadcast %cst_60 : f32 to vector<2x32xf32>
    %256 = arith.subf %254, %255 : vector<2x32xf32>
    %257 = vector.extract_strided_slice %249 {offsets = [0, 96], sizes = [2, 32], strides = [1, 1]} : vector<2x128xf32> to vector<2x32xf32>
    %258 = arith.mulf %251, %238 : vector<2x32xf32>
    %259 = arith.mulf %250, %256 : vector<2x32xf32>
    %260 = arith.addf %258, %259 : vector<2x32xf32>
    %261 = math.tanh %260 : vector<2x32xf32>
    %262 = arith.mulf %257, %261 : vector<2x32xf32>
    %263 = vector.shape_cast %262 : vector<2x32xf32> to vector<2x1x32xf32>
    %c0_61 = arith.constant 0 : index
    %c2 = arith.constant 2 : index
    %c0_62 = arith.constant 0 : index
    %264 = vector.load %arg6[%c0_61, %c2, %c0_62] : memref<2x8x32xf32, #tpu.memory_space<vmem>>, vector<2x1x32xf32>
    tpu.vector_store %arg6[%c0_61, %c2, %c0_62], %263 {strides = array<i32>} : memref<2x8x32xf32, #tpu.memory_space<vmem>>, vector<2x1x32xf32>,
    %cst_63 = arith.constant dense<0.000000e+00> : vector<2x128xf32>
    %265 = tpu.matmul %262, %4, %cst_63 {dimension_numbers = #tpu.dot_dimension_numbers<[1], [0], [0], [1], [0, 0, 1, 1], [], []>} : vector<2x32xf32>, vector<32x128xf32>, vector<2x128xf32> -> vector<2x128xf32>
    %266 = arith.addf %265, %12 : vector<2x128xf32>
    %267 = arith.negf %266 : vector<2x128xf32>
    %268 = math.exp %267 : vector<2x128xf32>
    %cst_64 = arith.constant 1.000000e+00 : f32
    %269 = vector.broadcast %cst_64 : f32 to vector<2x128xf32>
    %270 = arith.addf %269, %268 : vector<2x128xf32>
    %271 = arith.divf %269, %270 : vector<2x128xf32>
    %272 = vector.extract_strided_slice %271 {offsets = [0, 0], sizes = [2, 32], strides = [1, 1]} : vector<2x128xf32> to vector<2x32xf32>
    %273 = vector.extract_strided_slice %271 {offsets = [0, 32], sizes = [2, 32], strides = [1, 1]} : vector<2x128xf32> to vector<2x32xf32>
    %274 = vector.extract_strided_slice %271 {offsets = [0, 64], sizes = [2, 32], strides = [1, 1]} : vector<2x128xf32> to vector<2x32xf32>
    %cst_65 = arith.constant 2.000000e+00 : f32
    %275 = vector.broadcast %cst_65 : f32 to vector<2x32xf32>
    %276 = arith.mulf %275, %274 : vector<2x32xf32>
    %cst_66 = arith.constant 1.000000e+00 : f32
    %277 = vector.broadcast %cst_66 : f32 to vector<2x32xf32>
    %278 = arith.subf %276, %277 : vector<2x32xf32>
    %279 = vector.extract_strided_slice %271 {offsets = [0, 96], sizes = [2, 32], strides = [1, 1]} : vector<2x128xf32> to vector<2x32xf32>
    %280 = arith.mulf %273, %260 : vector<2x32xf32>
    %281 = arith.mulf %272, %278 : vector<2x32xf32>
    %282 = arith.addf %280, %281 : vector<2x32xf32>
    %283 = math.tanh %282 : vector<2x32xf32>
    %284 = arith.mulf %279, %283 : vector<2x32xf32>
    %285 = vector.shape_cast %284 : vector<2x32xf32> to vector<2x1x32xf32>
    %c0_67 = arith.constant 0 : index
    %c3 = arith.constant 3 : index
    %c0_68 = arith.constant 0 : index
    %286 = vector.load %arg6[%c0_67, %c3, %c0_68] : memref<2x8x32xf32, #tpu.memory_space<vmem>>, vector<2x1x32xf32>
    tpu.vector_store %arg6[%c0_67, %c3, %c0_68], %285 {strides = array<i32>} : memref<2x8x32xf32, #tpu.memory_space<vmem>>, vector<2x1x32xf32>,
    %cst_69 = arith.constant dense<0.000000e+00> : vector<2x128xf32>
    %287 = tpu.matmul %284, %4, %cst_69 {dimension_numbers = #tpu.dot_dimension_numbers<[1], [0], [0], [1], [0, 0, 1, 1], [], []>} : vector<2x32xf32>, vector<32x128xf32>, vector<2x128xf32> -> vector<2x128xf32>
    %288 = arith.addf %287, %12 : vector<2x128xf32>
    %289 = arith.negf %288 : vector<2x128xf32>
    %290 = math.exp %289 : vector<2x128xf32>
    %cst_70 = arith.constant 1.000000e+00 : f32
    %291 = vector.broadcast %cst_70 : f32 to vector<2x128xf32>
    %292 = arith.addf %291, %290 : vector<2x128xf32>
    %293 = arith.divf %291, %292 : vector<2x128xf32>
    %294 = vector.extract_strided_slice %293 {offsets = [0, 0], sizes = [2, 32], strides = [1, 1]} : vector<2x128xf32> to vector<2x32xf32>
    %295 = vector.extract_strided_slice %293 {offsets = [0, 32], sizes = [2, 32], strides = [1, 1]} : vector<2x128xf32> to vector<2x32xf32>
    %296 = vector.extract_strided_slice %293 {offsets = [0, 64], sizes = [2, 32], strides = [1, 1]} : vector<2x128xf32> to vector<2x32xf32>
    %cst_71 = arith.constant 2.000000e+00 : f32
    %297 = vector.broadcast %cst_71 : f32 to vector<2x32xf32>
    %298 = arith.mulf %297, %296 : vector<2x32xf32>
    %cst_72 = arith.constant 1.000000e+00 : f32
    %299 = vector.broadcast %cst_72 : f32 to vector<2x32xf32>
    %300 = arith.subf %298, %299 : vector<2x32xf32>
    %301 = vector.extract_strided_slice %293 {offsets = [0, 96], sizes = [2, 32], strides = [1, 1]} : vector<2x128xf32> to vector<2x32xf32>
    %302 = arith.mulf %295, %282 : vector<2x32xf32>
    %303 = arith.mulf %294, %300 : vector<2x32xf32>
    %304 = arith.addf %302, %303 : vector<2x32xf32>
    %305 = math.tanh %304 : vector<2x32xf32>
    %306 = arith.mulf %301, %305 : vector<2x32xf32>
    %307 = vector.shape_cast %306 : vector<2x32xf32> to vector<2x1x32xf32>
    %c0_73 = arith.constant 0 : index
    %c4 = arith.constant 4 : index
    %c0_74 = arith.constant 0 : index
    %308 = vector.load %arg6[%c0_73, %c4, %c0_74] : memref<2x8x32xf32, #tpu.memory_space<vmem>>, vector<2x1x32xf32>
    tpu.vector_store %arg6[%c0_73, %c4, %c0_74], %307 {strides = array<i32>} : memref<2x8x32xf32, #tpu.memory_space<vmem>>, vector<2x1x32xf32>,
    %cst_75 = arith.constant dense<0.000000e+00> : vector<2x128xf32>
    %309 = tpu.matmul %306, %4, %cst_75 {dimension_numbers = #tpu.dot_dimension_numbers<[1], [0], [0], [1], [0, 0, 1, 1], [], []>} : vector<2x32xf32>, vector<32x128xf32>, vector<2x128xf32> -> vector<2x128xf32>
    %310 = arith.addf %309, %12 : vector<2x128xf32>
    %311 = arith.negf %310 : vector<2x128xf32>
    %312 = math.exp %311 : vector<2x128xf32>
    %cst_76 = arith.constant 1.000000e+00 : f32
    %313 = vector.broadcast %cst_76 : f32 to vector<2x128xf32>
    %314 = arith.addf %313, %312 : vector<2x128xf32>
    %315 = arith.divf %313, %314 : vector<2x128xf32>
    %316 = vector.extract_strided_slice %315 {offsets = [0, 0], sizes = [2, 32], strides = [1, 1]} : vector<2x128xf32> to vector<2x32xf32>
    %317 = vector.extract_strided_slice %315 {offsets = [0, 32], sizes = [2, 32], strides = [1, 1]} : vector<2x128xf32> to vector<2x32xf32>
    %318 = vector.extract_strided_slice %315 {offsets = [0, 64], sizes = [2, 32], strides = [1, 1]} : vector<2x128xf32> to vector<2x32xf32>
    %cst_77 = arith.constant 2.000000e+00 : f32
    %319 = vector.broadcast %cst_77 : f32 to vector<2x32xf32>
    %320 = arith.mulf %319, %318 : vector<2x32xf32>
    %cst_78 = arith.constant 1.000000e+00 : f32
    %321 = vector.broadcast %cst_78 : f32 to vector<2x32xf32>
    %322 = arith.subf %320, %321 : vector<2x32xf32>
    %323 = vector.extract_strided_slice %315 {offsets = [0, 96], sizes = [2, 32], strides = [1, 1]} : vector<2x128xf32> to vector<2x32xf32>
    %324 = arith.mulf %317, %304 : vector<2x32xf32>
    %325 = arith.mulf %316, %322 : vector<2x32xf32>
    %326 = arith.addf %324, %325 : vector<2x32xf32>
    %327 = math.tanh %326 : vector<2x32xf32>
    %328 = arith.mulf %323, %327 : vector<2x32xf32>
    %329 = vector.shape_cast %328 : vector<2x32xf32> to vector<2x1x32xf32>
    %c0_79 = arith.constant 0 : index
    %c5 = arith.constant 5 : index
    %c0_80 = arith.constant 0 : index
    %330 = vector.load %arg6[%c0_79, %c5, %c0_80] : memref<2x8x32xf32, #tpu.memory_space<vmem>>, vector<2x1x32xf32>
    tpu.vector_store %arg6[%c0_79, %c5, %c0_80], %329 {strides = array<i32>} : memref<2x8x32xf32, #tpu.memory_space<vmem>>, vector<2x1x32xf32>,
    %cst_81 = arith.constant dense<0.000000e+00> : vector<2x128xf32>
    %331 = tpu.matmul %328, %4, %cst_81 {dimension_numbers = #tpu.dot_dimension_numbers<[1], [0], [0], [1], [0, 0, 1, 1], [], []>} : vector<2x32xf32>, vector<32x128xf32>, vector<2x128xf32> -> vector<2x128xf32>
    %332 = arith.addf %331, %12 : vector<2x128xf32>
    %333 = arith.negf %332 : vector<2x128xf32>
    %334 = math.exp %333 : vector<2x128xf32>
    %cst_82 = arith.constant 1.000000e+00 : f32
    %335 = vector.broadcast %cst_82 : f32 to vector<2x128xf32>
    %336 = arith.addf %335, %334 : vector<2x128xf32>
    %337 = arith.divf %335, %336 : vector<2x128xf32>
    %338 = vector.extract_strided_slice %337 {offsets = [0, 0], sizes = [2, 32], strides = [1, 1]} : vector<2x128xf32> to vector<2x32xf32>
    %339 = vector.extract_strided_slice %337 {offsets = [0, 32], sizes = [2, 32], strides = [1, 1]} : vector<2x128xf32> to vector<2x32xf32>
    %340 = vector.extract_strided_slice %337 {offsets = [0, 64], sizes = [2, 32], strides = [1, 1]} : vector<2x128xf32> to vector<2x32xf32>
    %cst_83 = arith.constant 2.000000e+00 : f32
    %341 = vector.broadcast %cst_83 : f32 to vector<2x32xf32>
    %342 = arith.mulf %341, %340 : vector<2x32xf32>
    %cst_84 = arith.constant 1.000000e+00 : f32
    %343 = vector.broadcast %cst_84 : f32 to vector<2x32xf32>
    %344 = arith.subf %342, %343 : vector<2x32xf32>
    %345 = vector.extract_strided_slice %337 {offsets = [0, 96], sizes = [2, 32], strides = [1, 1]} : vector<2x128xf32> to vector<2x32xf32>
    %346 = arith.mulf %339, %326 : vector<2x32xf32>
    %347 = arith.mulf %338, %344 : vector<2x32xf32>
    %348 = arith.addf %346, %347 : vector<2x32xf32>
    %349 = math.tanh %348 : vector<2x32xf32>
    %350 = arith.mulf %345, %349 : vector<2x32xf32>
    %351 = vector.shape_cast %350 : vector<2x32xf32> to vector<2x1x32xf32>
    %c0_85 = arith.constant 0 : index
    %c6 = arith.constant 6 : index
    %c0_86 = arith.constant 0 : index
    %352 = vector.load %arg6[%c0_85, %c6, %c0_86] : memref<2x8x32xf32, #tpu.memory_space<vmem>>, vector<2x1x32xf32>
    tpu.vector_store %arg6[%c0_85, %c6, %c0_86], %351 {strides = array<i32>} : memref<2x8x32xf32, #tpu.memory_space<vmem>>, vector<2x1x32xf32>,
    %cst_87 = arith.constant dense<0.000000e+00> : vector<2x128xf32>
    %353 = tpu.matmul %350, %4, %cst_87 {dimension_numbers = #tpu.dot_dimension_numbers<[1], [0], [0], [1], [0, 0, 1, 1], [], []>} : vector<2x32xf32>, vector<32x128xf32>, vector<2x128xf32> -> vector<2x128xf32>
    %354 = arith.addf %353, %12 : vector<2x128xf32>
    %355 = arith.negf %354 : vector<2x128xf32>
    %356 = math.exp %355 : vector<2x128xf32>
    %cst_88 = arith.constant 1.000000e+00 : f32
    %357 = vector.broadcast %cst_88 : f32 to vector<2x128xf32>
    %358 = arith.addf %357, %356 : vector<2x128xf32>
    %359 = arith.divf %357, %358 : vector<2x128xf32>
    %360 = vector.extract_strided_slice %359 {offsets = [0, 0], sizes = [2, 32], strides = [1, 1]} : vector<2x128xf32> to vector<2x32xf32>
    %361 = vector.extract_strided_slice %359 {offsets = [0, 32], sizes = [2, 32], strides = [1, 1]} : vector<2x128xf32> to vector<2x32xf32>
    %362 = vector.extract_strided_slice %359 {offsets = [0, 64], sizes = [2, 32], strides = [1, 1]} : vector<2x128xf32> to vector<2x32xf32>
    %cst_89 = arith.constant 2.000000e+00 : f32
    %363 = vector.broadcast %cst_89 : f32 to vector<2x32xf32>
    %364 = arith.mulf %363, %362 : vector<2x32xf32>
    %cst_90 = arith.constant 1.000000e+00 : f32
    %365 = vector.broadcast %cst_90 : f32 to vector<2x32xf32>
    %366 = arith.subf %364, %365 : vector<2x32xf32>
    %367 = vector.extract_strided_slice %359 {offsets = [0, 96], sizes = [2, 32], strides = [1, 1]} : vector<2x128xf32> to vector<2x32xf32>
    %368 = arith.mulf %361, %348 : vector<2x32xf32>
    %369 = arith.mulf %360, %366 : vector<2x32xf32>
    %370 = arith.addf %368, %369 : vector<2x32xf32>
    %371 = math.tanh %370 : vector<2x32xf32>
    %372 = arith.mulf %367, %371 : vector<2x32xf32>
    %373 = vector.shape_cast %372 : vector<2x32xf32> to vector<2x1x32xf32>
    %c0_91 = arith.constant 0 : index
    %c7 = arith.constant 7 : index
    %c0_92 = arith.constant 0 : index
    %374 = vector.load %arg6[%c0_91, %c7, %c0_92] : memref<2x8x32xf32, #tpu.memory_space<vmem>>, vector<2x1x32xf32>
    tpu.vector_store %arg6[%c0_91, %c7, %c0_92], %373 {strides = array<i32>} : memref<2x8x32xf32, #tpu.memory_space<vmem>>, vector<2x1x32xf32>,
    %c0_93 = arith.constant 0 : index
    %c0_94 = arith.constant 0 : index
    %c0_95 = arith.constant 0 : index
    %375 = vector.load %arg6[%c0_93, %c0_94, %c0_95] : memref<2x8x32xf32, #tpu.memory_space<vmem>>, vector<2x8x32xf32>
    %376 = vector.shape_cast %375 : vector<2x8x32xf32> to vector<16x32xf32>
    %cst_96 = arith.constant dense<0.000000e+00> : vector<16x73xf32>
    %377 = tpu.matmul %376, %14, %cst_96 {dimension_numbers = #tpu.dot_dimension_numbers<[1], [0], [0], [1], [0, 0, 1, 1], [], []>} : vector<16x32xf32>, vector<32x73xf32>, vector<16x73xf32> -> vector<16x73xf32>
    %378 = vector.broadcast %13 : vector<1x73xf32> to vector<16x73xf32>
    %379 = arith.addf %377, %378 : vector<16x73xf32>
    %380 = vector.shape_cast %379 : vector<16x73xf32> to vector<2x8x73xf32>
    %c0_97 = arith.constant 0 : index
    %c0_98 = arith.constant 0 : index
    %c0_99 = arith.constant 0 : index
    %381 = vector.load %arg5[%c0_97, %c0_98, %c0_99] : memref<2x8x73xf32, #tpu.memory_space<vmem>>, vector<2x8x73xf32>
    tpu.vector_store %arg5[%c0_97, %c0_98, %c0_99], %380 {strides = array<i32>} : memref<2x8x73xf32, #tpu.memory_space<vmem>>, vector<2x8x73xf32>,
    return
  }
}

</mosaic_0001>

<llo_original>
// kernel: lstm_body_ae_forward.1
$region0: #{lstm_body_ae_forward.1}
  #allocation0 [shape = 'u32[]', space=smem, size = 0x4, offset = 0x4, fixed_abs, tag = 'smem constant byte address 0x4 - core index']
  #allocation1 [shape = 'u32[144,128]{1,0:T(1,128)}', space=vmem, size = 0x12000, scoped, tag = 'internal scratch']
  #allocation2 [shape = 'f32[2,8,32]{2,1,0:T(8,128)}', space=vmem, size = 0x2000, scoped, tag = 'scratch operand']
  %s0 = inlined_call_operand.vmem [shape: f32[2,8,73], index: 0, kind: input, shape index: {}]
  %s1 = inlined_call_operand.vmem [shape: f32[73,128], index: 1, kind: input, shape index: {}]
  %s2 = inlined_call_operand.vmem [shape: f32[32,384], index: 2, kind: input, shape index: {}]
  %s3 = inlined_call_operand.vmem [shape: f32[4,128], index: 3, kind: input, shape index: {}]
  %s4 = inlined_call_operand.vmem [shape: f32[32,73], index: 4, kind: input, shape index: {}]
  %s5 = inlined_call_operand.hbm [shape: f32[2,8,73], index: 5, kind: output, shape index: {}]
  %s6 = sld [smem:[#allocation0]]
  $region30: #{lstm_body_ae_forward.1} parent=0
    _
  %s8 = ssub.s32 1, %s6
  %s9 = scalar_select 0, %s8, %s6
  $region1: #{lstm_body_ae_forward.1} parent=0
    #allocation3 [shape = 'u8[8192]{0}', space=vmem, size = 0x2000, scoped, tag = 'output window, operand 0, single buffered']
    #allocation4 [shape = 's32[1]{0}', space=sflag, size = 0x4, scoped, tag = 'scoped memory for lstm_body_ae_forward.1']
    %10 = vsyncpa [#allocation4], 0
    // Predicated region
    $region2: #{lstm_body_ae_forward.1} parent=1 // pred_check
      _
    $region3: #{lstm_body_ae_forward.1} parent=1 // pred_check_branch
      %12 = sbr.rel (0) target = $region5
    $region4: #{lstm_body_ae_forward.1} parent=1 // pred_region
      _
    $region5: #{lstm_body_ae_forward.1} parent=1 // pred_fallthru
      _
    // Predicated region
    $region6: #{lstm_body_ae_forward.1} parent=1 // pred_check
      _
    $region7: #{lstm_body_ae_forward.1} parent=1 // pred_check_branch
      %14 = sbr.rel (0) target = $region9
    $region8: #{lstm_body_ae_forward.1} parent=1 // pred_region
      _
    $region9: #{lstm_body_ae_forward.1} parent=1 // pred_fallthru
      _
    // Predicated region
    $region10: #{lstm_body_ae_forward.1} parent=1 // pred_check
      _
    $region11: #{lstm_body_ae_forward.1} parent=1 // pred_check_branch
      %16 = sbr.rel (0) target = $region13
    $region12: #{lstm_body_ae_forward.1} parent=1 // pred_region
      _
    $region13: #{lstm_body_ae_forward.1} parent=1 // pred_fallthru
      _
    // Predicated region
    $region14: #{lstm_body_ae_forward.1} parent=1 // pred_check
      _
    $region15: #{lstm_body_ae_forward.1} parent=1 // pred_check_branch
      %18 = sbr.rel (0) target = $region17
    $region16: #{lstm_body_ae_forward.1} parent=1 // pred_region
      _
    $region17: #{lstm_body_ae_forward.1} parent=1 // pred_fallthru
      _
    // Predicated region
    $region18: #{lstm_body_ae_forward.1} parent=1 // pred_check
      _
    $region19: #{lstm_body_ae_forward.1} parent=1 // pred_check_branch
      %20 = sbr.rel (0) target = $region21
    $region20: #{lstm_body_ae_forward.1} parent=1 // pred_region
      _
    $region21: #{lstm_body_ae_forward.1} parent=1 // pred_fallthru
      _
    %v21 = vld [vmem:[%s0] sm:$0xff]
    %v22 = vld [vmem:[%s0 + $0x8] sm:$0xff]
    %v23 = vld [vmem:[%s2] sm:$0xff]
    %v24 = vld [vmem:[%s2 + $0x8] sm:$0xff]
    %v25 = vld [vmem:[%s2 + $0x10] sm:$0xff]
    %v26 = vld [vmem:[%s2 + $0x18] sm:$0xff]
    %v27 = vld [vmem:[%s2 + $0x20] sm:$0xff]
    %v28 = vld [vmem:[%s2 + $0x28] sm:$0xff]
    %v29 = vld [vmem:[%s2 + $0x30] sm:$0xff]
    %v30 = vld [vmem:[%s2 + $0x38] sm:$0xff]
    %v31 = vld [vmem:[%s2 + $0x40] sm:$0xff]
    %v32 = vld [vmem:[%s2 + $0x48] sm:$0xff]
    %v33 = vld [vmem:[%s2 + $0x50] sm:$0xff]
    %v34 = vld [vmem:[%s2 + $0x58] sm:$0xff]
    %v35 = vld [vmem:[%s3] sm:$0xf]
    %v36 = vlaneseq
    %v37 = vshrl.u32 %v36, 7
    %v38 = vsub.s32 1, %v37
    %v39 = vrot.slane %v35, %v38
    %v40 = vlaneseq
    %v41 = vshrl.u32 %v40, 7
    %v42 = vsub.s32 2, %v41
    %v43 = vrot.slane %v35, %v42
    %v44 = vld [vmem:[%s4] sm:$0xff]
    %v45 = vld [vmem:[%s4 + $0x8] sm:$0xff]
    %v46 = vld [vmem:[%s4 + $0x10] sm:$0xff]
    %v47 = vld [vmem:[%s4 + $0x18] sm:$0xff]
    %v48 = vld [vmem:[%s1] sm:$0xff]
    %v49 = vld [vmem:[%s1 + $0x8] sm:$0xff]
    %v50 = vld [vmem:[%s1 + $0x10] sm:$0xff]
    %v51 = vld [vmem:[%s1 + $0x18] sm:$0xff]
    %v52 = vld [vmem:[%s1 + $0x20] sm:$0xff]
    %v53 = vld [vmem:[%s1 + $0x28] sm:$0xff]
    %v54 = vld [vmem:[%s1 + $0x30] sm:$0xff]
    %v55 = vld [vmem:[%s1 + $0x38] sm:$0xff]
    %v56 = vld [vmem:[%s1 + $0x40] sm:$0xff]
    %v57 = vld [vmem:[%s1 + $0x48] sm:$0x1]
    %v58 = vlaneseq
    %v59 = vshrl.u32 %v58, 7
    %v60 = vsub.s32 0, %v59
    %v61 = vrot.slane %v35, %v60
    %vm62 = vcmask 596992
    %v64 = vsel %vm62, %v21, 0
    %v67 = vsel %vm62, %v22, 0
    %vm69 = vcmask 1040384
    %v71 = vsel %vm69, %v57, 0
    %73 = vmatprep.subr.mxu0 0.0
    %74 = vmatpush1.msra.mxu0 %v48
    %75 = vmatprep.subr.mxu0 0.0
    %76 = vmatpush1.msra.mxu0 %v49
    %77 = vmatprep.subr.mxu0 0.0
    %78 = vmatpush1.msra.mxu0 %v50
    %79 = vmatprep.subr.mxu0 0.0
    %80 = vmatpush1.msra.mxu0 %v51
    %81 = vmatprep.subr.mxu0 0.0
    %82 = vmatpush1.msra.mxu0 %v52
    %83 = vmatprep.subr.mxu0 0.0
    %84 = vmatpush1.msra.mxu0 %v53
    %85 = vmatprep.subr.mxu0 0.0
    %86 = vmatpush1.msra.mxu0 %v54
    %87 = vmatprep.subr.mxu0 0.0
    %88 = vmatpush1.msra.mxu0 %v55
    %89 = vmatprep.subr.mxu0 0.0
    %90 = vmatpush1.msra.mxu0 %v56
    %91 = vmatprep.subr.mxu0 0.0
    %92 = vmatpush1.msra.mxu0 %v71
    %93 = vmatprep.subr.mxu0 0.0
    %94 = vmatpush1.msra.mxu0 0.0
    %95 = vmatprep.subr.mxu0 0.0
    %96 = vmatpush1.msra.mxu0 0.0
    %97 = vmatprep.subr.mxu0 0.0
    %98 = vmatpush1.msra.mxu0 0.0
    %99 = vmatprep.subr.mxu0 0.0
    %100 = vmatpush1.msra.mxu0 0.0
    %101 = vmatprep.subr.mxu0 0.0
    %102 = vmatpush1.msra.mxu0 0.0
    %103 = vmatprep.subr.mxu0 0.0
    %104 = vmatpush1.msra.mxu0 0.0
    %105 = vmatprep.subr.mxu0 0.0
    %106 = vmatpush1.msra.mxu0 0.0
    %107 = vmatprep.subr.mxu0 0.0
    %108 = vmatpush1.msra.mxu0 0.0
    %109 = vmatprep.subr.mxu0 0.0
    %110 = vmatpush1.msra.mxu0 0.0
    %111 = vmatprep.subr.mxu0 0.0
    %112 = vmatpush1.msra.mxu0 0.0
    %113 = vmatprep.subr.mxu0 0.0
    %114 = vmatpush1.msra.mxu0 0.0
    %115 = vmatprep.subr.mxu0 0.0
    %116 = vmatpush1.msra.mxu0 0.0
    %117 = vmatprep.subr.mxu0 0.0
    %118 = vmatpush1.msra.mxu0 0.0
    %119 = vmatprep.subr.mxu0 0.0
    %120 = vmatpush1.msra.mxu0 0.0
    %121 = vmatprep.subr.mxu0 0.0
    %122 = vmatpush1.msra.mxu0 0.0
    %123 = vmatprep.subr.mxu0 0.0
    %124 = vmatpush1.msra.mxu0 0.0
    %125 = vmatprep.subr.mxu0 0.0
    %126 = vmatpush1.msra.mxu0 0.0
    %127 = vmatprep.subr.mxu0 0.0
    %128 = vmatpush1.msra.mxu0 0.0
    %129 = vmatprep.subr.mxu0 0.0
    %130 = vmatpush1.msra.mxu0 0.0
    %131 = vmatprep.subr.mxu0 0.0
    %132 = vmatpush1.msra.mxu0 0.0
    %133 = vmatprep.subr.mxu0 0.0
    %134 = vmatpush1.msra.mxu0 0.0
    %135 = vmatprep.subr.mxu0 0.0
    %136 = vmatpush1.msra.mxu0 0.0
    %137 = vmatprep.mubr.f32.mxu0 0.0
    %138 = vmatmul.mubr.f32.gmra.mrb[0].mxu0 %v64
    %v139 = vpop.f32.mrb[0].mxu0
    %v140 = vadd.f32 %v61, %v139
    %v141 = vpop.f32.mrb[0].mxu0
    %142 = vmatprep.mubr.f32.mxu0 0.0
    %143 = vmatmul.mubr.f32.gmra.mrb[0].mxu0 %v67
    %v144 = vpop.f32.mrb[0].mxu0
    %v145 = vadd.f32 %v61, %v144
    %v146 = vpop.f32.mrb[0].mxu0
    %147 = vdwg.mxu0
    %vm148 = vcmask 261120
    %v150 = vsel %vm148, 0.0, 0
    %152 = vmatprep.subr.mxu0 0.0
    %153 = vmatpush1.msra.mxu0 %v23
    %154 = vmatprep.subr.mxu0 0.0
    %155 = vmatpush1.msra.mxu0 %v26
    %156 = vmatprep.subr.mxu0 0.0
    %157 = vmatpush1.msra.mxu0 %v29
    %158 = vmatprep.subr.mxu0 0.0
    %159 = vmatpush1.msra.mxu0 %v32
    %160 = vmatprep.subr.mxu0 0.0
    %161 = vmatpush1.msra.mxu0 0.0
    %162 = vmatprep.subr.mxu0 0.0
    %163 = vmatpush1.msra.mxu0 0.0
    %164 = vmatprep.subr.mxu0 0.0
    %165 = vmatpush1.msra.mxu0 0.0
    %166 = vmatprep.subr.mxu0 0.0
    %167 = vmatpush1.msra.mxu0 0.0
    %168 = vmatprep.subr.mxu0 0.0
    %169 = vmatpush1.msra.mxu0 0.0
    %170 = vmatprep.subr.mxu0 0.0
    %171 = vmatpush1.msra.mxu0 0.0
    %172 = vmatprep.subr.mxu0 0.0
    %173 = vmatpush1.msra.mxu0 0.0
    %174 = vmatprep.subr.mxu0 0.0
    %175 = vmatpush1.msra.mxu0 0.0
    %176 = vmatprep.subr.mxu0 0.0
    %177 = vmatpush1.msra.mxu0 0.0
    %178 = vmatprep.subr.mxu0 0.0
    %179 = vmatpush1.msra.mxu0 0.0
    %180 = vmatprep.subr.mxu0 0.0
    %181 = vmatpush1.msra.mxu0 0.0
    %182 = vmatprep.subr.mxu0 0.0
    %183 = vmatpush1.msra.mxu0 0.0
    %184 = vmatprep.subr.mxu0 0.0
    %185 = vmatpush1.msra.mxu0 0.0
    %186 = vmatprep.subr.mxu0 0.0
    %187 = vmatpush1.msra.mxu0 0.0
    %188 = vmatprep.subr.mxu0 0.0
    %189 = vmatpush1.msra.mxu0 0.0
    %190 = vmatprep.subr.mxu0 0.0
    %191 = vmatpush1.msra.mxu0 0.0
    %192 = vmatprep.subr.mxu0 0.0
    %193 = vmatpush1.msra.mxu0 0.0
    %194 = vmatprep.subr.mxu0 0.0
    %195 = vmatpush1.msra.mxu0 0.0
    %196 = vmatprep.subr.mxu0 0.0
    %197 = vmatpush1.msra.mxu0 0.0
    %198 = vmatprep.subr.mxu0 0.0
    %199 = vmatpush1.msra.mxu0 0.0
    %200 = vmatprep.subr.mxu0 0.0
    %201 = vmatpush1.msra.mxu0 0.0
    %202 = vmatprep.subr.mxu0 0.0
    %203 = vmatpush1.msra.mxu0 0.0
    %204 = vmatprep.subr.mxu0 0.0
    %205 = vmatpush1.msra.mxu0 0.0
    %206 = vmatprep.subr.mxu0 0.0
    %207 = vmatpush1.msra.mxu0 0.0
    %208 = vmatprep.subr.mxu0 0.0
    %209 = vmatpush1.msra.mxu0 0.0
    %210 = vmatprep.subr.mxu0 0.0
    %211 = vmatpush1.msra.mxu0 0.0
    %212 = vmatprep.subr.mxu0 0.0
    %213 = vmatpush1.msra.mxu0 0.0
    %214 = vmatprep.subr.mxu0 0.0
    %215 = vmatpush1.msra.mxu0 0.0
    %216 = vmatprep.mubr.f32.mxu0 0.0
    %217 = vmatmul.mubr.f32.gmra.mrb[0].mxu0 %v150
    %v218 = vpop.f32.mrb[0].mxu0
    %v219 = vadd.f32 0.0, %v218
    %v220 = vpop.f32.mrb[0].mxu0
    %221 = vdwg.mxu0
    %v223 = vrot.slane %v219, 1
    %v226 = vadd.f32 %v140, %v219
    %v227 = vadd.f32 %v145, %v223
    %v228 = vxor.u32 %v226, 2147483648
    %v229 = vxor.u32 %v227, 2147483648
    %v230 = vmul.f32 %v228, 1.442695
    %v231 = vpow.pop %v230
    %v232 = vmul.f32 %v229, 1.442695
    %v233 = vpow.pop %v232
    %v234 = vadd.f32 %v231, 1.0
    %v235 = vadd.f32 %v233, 1.0
    %v236 = vrcp.pop %v234
    %v237 = vmul.f32 1.0, %v236
    %v238 = vrcp.pop %v235
    %v239 = vmul.f32 1.0, %v238
    %v240 = vmul.f32 %v237, 2.0
    %v241 = vmul.f32 %v239, 2.0
    %v242 = vsub.f32 %v240, 1.0
    %v243 = vsub.f32 %v241, 1.0
    %v244 = vmul.f32 %v237, 0.0
    %v245 = vmul.f32 %v239, 0.0
    %248 = vrot.lane.b32.xlu0 %v242, 64
    %v249 = vpop.permute.xlu0 %248
    %250 = vrot.lane.b32.xlu0 %v243, 64
    %v251 = vpop.permute.xlu0 %250
    %v254 = vmul.f32 %v237, %v249
    %v255 = vmul.f32 %v239, %v251
    %258 = vrot.lane.b32.xlu0 %v254, 32
    %v259 = vpop.permute.xlu0 %258
    %260 = vrot.lane.b32.xlu0 %v255, 32
    %v261 = vpop.permute.xlu0 %260
    %v264 = vadd.f32 %v244, %v259
    %v265 = vadd.f32 %v245, %v261
    %v266 = vtanh.pop %v264
    %v267 = vtanh.pop %v265
    %270 = vrot.lane.b32.xlu0 %v266, 64
    %v271 = vpop.permute.xlu0 %270
    %272 = vrot.lane.b32.xlu0 %v267, 64
    %v273 = vpop.permute.xlu0 %272
    %v276 = vmul.f32 %v237, %v271
    %v277 = vmul.f32 %v239, %v273
    %v280 = vrot.slane %v277, 7
    %vm281 = vcmask 1041409
    %v282 = vsel %vm281, %v280, %v276
    %283 = vrot.lane.b32.xlu0 %v282, 32
    %v284 = vpop.permute.xlu0 %283
    %v285 = vsel %vm148, %v284, 0
    %287 = vmatprep.subr.mxu0 0.0
    %288 = vmatpush1.msra.mxu0 %v23
    %289 = vmatprep.subr.mxu0 0.0
    %290 = vmatpush1.msra.mxu0 %v26
    %291 = vmatprep.subr.mxu0 0.0
    %292 = vmatpush1.msra.mxu0 %v29
    %293 = vmatprep.subr.mxu0 0.0
    %294 = vmatpush1.msra.mxu0 %v32
    %295 = vmatprep.subr.mxu0 0.0
    %296 = vmatpush1.msra.mxu0 0.0
    %297 = vmatprep.subr.mxu0 0.0
    %298 = vmatpush1.msra.mxu0 0.0
    %299 = vmatprep.subr.mxu0 0.0
    %300 = vmatpush1.msra.mxu0 0.0
    %301 = vmatprep.subr.mxu0 0.0
    %302 = vmatpush1.msra.mxu0 0.0
    %303 = vmatprep.subr.mxu0 0.0
    %304 = vmatpush1.msra.mxu0 0.0
    %305 = vmatprep.subr.mxu0 0.0
    %306 = vmatpush1.msra.mxu0 0.0
    %307 = vmatprep.subr.mxu0 0.0
    %308 = vmatpush1.msra.mxu0 0.0
    %309 = vmatprep.subr.mxu0 0.0
    %310 = vmatpush1.msra.mxu0 0.0
    %311 = vmatprep.subr.mxu0 0.0
    %312 = vmatpush1.msra.mxu0 0.0
    %313 = vmatprep.subr.mxu0 0.0
    %314 = vmatpush1.msra.mxu0 0.0
    %315 = vmatprep.subr.mxu0 0.0
    %316 = vmatpush1.msra.mxu0 0.0
    %317 = vmatprep.subr.mxu0 0.0
    %318 = vmatpush1.msra.mxu0 0.0
    %319 = vmatprep.subr.mxu0 0.0
    %320 = vmatpush1.msra.mxu0 0.0
    %321 = vmatprep.subr.mxu0 0.0
    %322 = vmatpush1.msra.mxu0 0.0
    %323 = vmatprep.subr.mxu0 0.0
    %324 = vmatpush1.msra.mxu0 0.0
    %325 = vmatprep.subr.mxu0 0.0
    %326 = vmatpush1.msra.mxu0 0.0
    %327 = vmatprep.subr.mxu0 0.0
    %328 = vmatpush1.msra.mxu0 0.0
    %329 = vmatprep.subr.mxu0 0.0
    %330 = vmatpush1.msra.mxu0 0.0
    %331 = vmatprep.subr.mxu0 0.0
    %332 = vmatpush1.msra.mxu0 0.0
    %333 = vmatprep.subr.mxu0 0.0
    %334 = vmatpush1.msra.mxu0 0.0
    %335 = vmatprep.subr.mxu0 0.0
    %336 = vmatpush1.msra.mxu0 0.0
    %337 = vmatprep.subr.mxu0 0.0
    %338 = vmatpush1.msra.mxu0 0.0
    %339 = vmatprep.subr.mxu0 0.0
    %340 = vmatpush1.msra.mxu0 0.0
    %341 = vmatprep.subr.mxu0 0.0
    %342 = vmatpush1.msra.mxu0 0.0
    %343 = vmatprep.subr.mxu0 0.0
    %344 = vmatpush1.msra.mxu0 0.0
    %345 = vmatprep.subr.mxu0 0.0
    %346 = vmatpush1.msra.mxu0 0.0
    %347 = vmatprep.subr.mxu0 0.0
    %348 = vmatpush1.msra.mxu0 0.0
    %349 = vmatprep.subr.mxu0 0.0
    %350 = vmatpush1.msra.mxu0 0.0
    %351 = vmatprep.mubr.f32.mxu0 0.0
    %352 = vmatmul.mubr.f32.gmra.mrb[0].mxu0 %v285
    %v353 = vpop.f32.mrb[0].mxu0
    %v354 = vadd.f32 0.0, %v353
    %v355 = vpop.f32.mrb[0].mxu0
    %356 = vdwg.mxu0
    %v358 = vrot.slane %v354, 7
    %v361 = vadd.f32 %v140, %v358
    %v362 = vadd.f32 %v145, %v354
    %v363 = vxor.u32 %v361, 2147483648
    %v364 = vxor.u32 %v362, 2147483648
    %v365 = vmul.f32 %v363, 1.442695
    %v366 = vpow.pop %v365
    %v367 = vmul.f32 %v364, 1.442695
    %v368 = vpow.pop %v367
    %v369 = vadd.f32 %v366, 1.0
    %v370 = vadd.f32 %v368, 1.0
    %v371 = vrcp.pop %v369
    %v372 = vmul.f32 1.0, %v371
    %v373 = vrcp.pop %v370
    %v374 = vmul.f32 1.0, %v373
    %v375 = vmul.f32 %v372, 2.0
    %v376 = vmul.f32 %v374, 2.0
    %v377 = vsub.f32 %v375, 1.0
    %v378 = vsub.f32 %v376, 1.0
    %v381 = vrot.slane %v264, 7
    %v382 = vrot.slane %v265, 7
    %v385 = vmul.f32 %v372, %v381
    %v386 = vmul.f32 %v374, %v382
    %389 = vrot.lane.b32.xlu0 %v377, 64
    %v390 = vpop.permute.xlu0 %389
    %391 = vrot.lane.b32.xlu0 %v378, 64
    %v392 = vpop.permute.xlu0 %391
    %v395 = vmul.f32 %v372, %v390
    %v396 = vmul.f32 %v374, %v392
    %399 = vrot.lane.b32.xlu0 %v395, 32
    %v400 = vpop.permute.xlu0 %399
    %401 = vrot.lane.b32.xlu0 %v396, 32
    %v402 = vpop.permute.xlu0 %401
    %v405 = vadd.f32 %v385, %v400
    %v406 = vadd.f32 %v386, %v402
    %v407 = vtanh.pop %v405
    %v408 = vtanh.pop %v406
    %411 = vrot.lane.b32.xlu0 %v407, 64
    %v412 = vpop.permute.xlu0 %411
    %413 = vrot.lane.b32.xlu0 %v408, 64
    %v414 = vpop.permute.xlu0 %413
    %v417 = vmul.f32 %v372, %v412
    %v418 = vmul.f32 %v374, %v414
    %v421 = vrot.slane %v417, 1
    %v422 = vsel %vm281, %v418, %v421
    %423 = vrot.lane.b32.xlu0 %v422, 32
    %v424 = vpop.permute.xlu0 %423
    %v425 = vsel %vm148, %v424, 0
    %427 = vmatprep.subr.mxu0 0.0
    %428 = vmatpush1.msra.mxu0 %v23
    %429 = vmatprep.subr.mxu0 0.0
    %430 = vmatpush1.msra.mxu0 %v26
    %431 = vmatprep.subr.mxu0 0.0
    %432 = vmatpush1.msra.mxu0 %v29
    %433 = vmatprep.subr.mxu0 0.0
    %434 = vmatpush1.msra.mxu0 %v32
    %435 = vmatprep.subr.mxu0 0.0
    %436 = vmatpush1.msra.mxu0 0.0
    %437 = vmatprep.subr.mxu0 0.0
    %438 = vmatpush1.msra.mxu0 0.0
    %439 = vmatprep.subr.mxu0 0.0
    %440 = vmatpush1.msra.mxu0 0.0
    %441 = vmatprep.subr.mxu0 0.0
    %442 = vmatpush1.msra.mxu0 0.0
    %443 = vmatprep.subr.mxu0 0.0
    %444 = vmatpush1.msra.mxu0 0.0
    %445 = vmatprep.subr.mxu0 0.0
    %446 = vmatpush1.msra.mxu0 0.0
    %447 = vmatprep.subr.mxu0 0.0
    %448 = vmatpush1.msra.mxu0 0.0
    %449 = vmatprep.subr.mxu0 0.0
    %450 = vmatpush1.msra.mxu0 0.0
    %451 = vmatprep.subr.mxu0 0.0
    %452 = vmatpush1.msra.mxu0 0.0
    %453 = vmatprep.subr.mxu0 0.0
    %454 = vmatpush1.msra.mxu0 0.0
    %455 = vmatprep.subr.mxu0 0.0
    %456 = vmatpush1.msra.mxu0 0.0
    %457 = vmatprep.subr.mxu0 0.0
    %458 = vmatpush1.msra.mxu0 0.0
    %459 = vmatprep.subr.mxu0 0.0
    %460 = vmatpush1.msra.mxu0 0.0
    %461 = vmatprep.subr.mxu0 0.0
    %462 = vmatpush1.msra.mxu0 0.0
    %463 = vmatprep.subr.mxu0 0.0
    %464 = vmatpush1.msra.mxu0 0.0
    %465 = vmatprep.subr.mxu0 0.0
    %466 = vmatpush1.msra.mxu0 0.0
    %467 = vmatprep.subr.mxu0 0.0
    %468 = vmatpush1.msra.mxu0 0.0
    %469 = vmatprep.subr.mxu0 0.0
    %470 = vmatpush1.msra.mxu0 0.0
    %471 = vmatprep.subr.mxu0 0.0
    %472 = vmatpush1.msra.mxu0 0.0
    %473 = vmatprep.subr.mxu0 0.0
    %474 = vmatpush1.msra.mxu0 0.0
    %475 = vmatprep.subr.mxu0 0.0
    %476 = vmatpush1.msra.mxu0 0.0
    %477 = vmatprep.subr.mxu0 0.0
    %478 = vmatpush1.msra.mxu0 0.0
    %479 = vmatprep.subr.mxu0 0.0
    %480 = vmatpush1.msra.mxu0 0.0
    %481 = vmatprep.subr.mxu0 0.0
    %482 = vmatpush1.msra.mxu0 0.0
    %483 = vmatprep.subr.mxu0 0.0
    %484 = vmatpush1.msra.mxu0 0.0
    %485 = vmatprep.subr.mxu0 0.0
    %486 = vmatpush1.msra.mxu0 0.0
    %487 = vmatprep.subr.mxu0 0.0
    %488 = vmatpush1.msra.mxu0 0.0
    %489 = vmatprep.subr.mxu0 0.0
    %490 = vmatpush1.msra.mxu0 0.0
    %491 = vmatprep.mubr.f32.mxu0 0.0
    %492 = vmatmul.mubr.f32.gmra.mrb[0].mxu0 %v425
    %v493 = vpop.f32.mrb[0].mxu0
    %v494 = vadd.f32 0.0, %v493
    %v495 = vpop.f32.mrb[0].mxu0
    %496 = vdwg.mxu0
    %v498 = vrot.slane %v494, 6
    %v499 = vrot.slane %v494, 7
    %v502 = vadd.f32 %v140, %v498
    %v503 = vadd.f32 %v145, %v499
    %v504 = vxor.u32 %v502, 2147483648
    %v505 = vxor.u32 %v503, 2147483648
    %v506 = vmul.f32 %v504, 1.442695
    %v507 = vpow.pop %v506
    %v508 = vmul.f32 %v505, 1.442695
    %v509 = vpow.pop %v508
    %v510 = vadd.f32 %v507, 1.0
    %v511 = vadd.f32 %v509, 1.0
    %v512 = vrcp.pop %v510
    %v513 = vmul.f32 1.0, %v512
    %v514 = vrcp.pop %v511
    %v515 = vmul.f32 1.0, %v514
    %v516 = vmul.f32 %v513, 2.0
    %v517 = vmul.f32 %v515, 2.0
    %v518 = vsub.f32 %v516, 1.0
    %v519 = vsub.f32 %v517, 1.0
    %v522 = vrot.slane %v405, 7
    %v523 = vrot.slane %v406, 7
    %v526 = vmul.f32 %v513, %v522
    %v527 = vmul.f32 %v515, %v523
    %530 = vrot.lane.b32.xlu0 %v518, 64
    %v531 = vpop.permute.xlu0 %530
    %532 = vrot.lane.b32.xlu0 %v519, 64
    %v533 = vpop.permute.xlu0 %532
    %v536 = vmul.f32 %v513, %v531
    %v537 = vmul.f32 %v515, %v533
    %540 = vrot.lane.b32.xlu0 %v536, 32
    %v541 = vpop.permute.xlu0 %540
    %542 = vrot.lane.b32.xlu0 %v537, 32
    %v543 = vpop.permute.xlu0 %542
    %v546 = vadd.f32 %v526, %v541
    %v547 = vadd.f32 %v527, %v543
    %v548 = vtanh.pop %v546
    %v549 = vtanh.pop %v547
    %552 = vrot.lane.b32.xlu0 %v548, 64
    %v553 = vpop.permute.xlu0 %552
    %554 = vrot.lane.b32.xlu0 %v549, 64
    %v555 = vpop.permute.xlu0 %554
    %v558 = vmul.f32 %v513, %v553
    %v559 = vmul.f32 %v515, %v555
    %v562 = vrot.slane %v558, 2
    %v563 = vrot.slane %v559, 1
    %v564 = vsel %vm281, %v563, %v562
    %565 = vrot.lane.b32.xlu0 %v564, 32
    %v566 = vpop.permute.xlu0 %565
    %v567 = vsel %vm148, %v566, 0
    %569 = vmatprep.subr.mxu0 0.0
    %570 = vmatpush1.msra.mxu0 %v23
    %571 = vmatprep.subr.mxu0 0.0
    %572 = vmatpush1.msra.mxu0 %v26
    %573 = vmatprep.subr.mxu0 0.0
    %574 = vmatpush1.msra.mxu0 %v29
    %575 = vmatprep.subr.mxu0 0.0
    %576 = vmatpush1.msra.mxu0 %v32
    %577 = vmatprep.subr.mxu0 0.0
    %578 = vmatpush1.msra.mxu0 0.0
    %579 = vmatprep.subr.mxu0 0.0
    %580 = vmatpush1.msra.mxu0 0.0
    %581 = vmatprep.subr.mxu0 0.0
    %582 = vmatpush1.msra.mxu0 0.0
    %583 = vmatprep.subr.mxu0 0.0
    %584 = vmatpush1.msra.mxu0 0.0
    %585 = vmatprep.subr.mxu0 0.0
    %586 = vmatpush1.msra.mxu0 0.0
    %587 = vmatprep.subr.mxu0 0.0
    %588 = vmatpush1.msra.mxu0 0.0
    %589 = vmatprep.subr.mxu0 0.0
    %590 = vmatpush1.msra.mxu0 0.0
    %591 = vmatprep.subr.mxu0 0.0
    %592 = vmatpush1.msra.mxu0 0.0
    %593 = vmatprep.subr.mxu0 0.0
    %594 = vmatpush1.msra.mxu0 0.0
    %595 = vmatprep.subr.mxu0 0.0
    %596 = vmatpush1.msra.mxu0 0.0
    %597 = vmatprep.subr.mxu0 0.0
    %598 = vmatpush1.msra.mxu0 0.0
    %599 = vmatprep.subr.mxu0 0.0
    %600 = vmatpush1.msra.mxu0 0.0
    %601 = vmatprep.subr.mxu0 0.0
    %602 = vmatpush1.msra.mxu0 0.0
    %603 = vmatprep.subr.mxu0 0.0
    %604 = vmatpush1.msra.mxu0 0.0
    %605 = vmatprep.subr.mxu0 0.0
    %606 = vmatpush1.msra.mxu0 0.0
    %607 = vmatprep.subr.mxu0 0.0
    %608 = vmatpush1.msra.mxu0 0.0
    %609 = vmatprep.subr.mxu0 0.0
    %610 = vmatpush1.msra.mxu0 0.0
    %611 = vmatprep.subr.mxu0 0.0
    %612 = vmatpush1.msra.mxu0 0.0
    %613 = vmatprep.subr.mxu0 0.0
    %614 = vmatpush1.msra.mxu0 0.0
    %615 = vmatprep.subr.mxu0 0.0
    %616 = vmatpush1.msra.mxu0 0.0
    %617 = vmatprep.subr.mxu0 0.0
    %618 = vmatpush1.msra.mxu0 0.0
    %619 = vmatprep.subr.mxu0 0.0
    %620 = vmatpush1.msra.mxu0 0.0
    %621 = vmatprep.subr.mxu0 0.0
    %622 = vmatpush1.msra.mxu0 0.0
    %623 = vmatprep.subr.mxu0 0.0
    %624 = vmatpush1.msra.mxu0 0.0
    %625 = vmatprep.subr.mxu0 0.0
    %626 = vmatpush1.msra.mxu0 0.0
    %627 = vmatprep.subr.mxu0 0.0
    %628 = vmatpush1.msra.mxu0 0.0
    %629 = vmatprep.subr.mxu0 0.0
    %630 = vmatpush1.msra.mxu0 0.0
    %631 = vmatprep.subr.mxu0 0.0
    %632 = vmatpush1.msra.mxu0 0.0
    %633 = vmatprep.mubr.f32.mxu0 0.0
    %634 = vmatmul.mubr.f32.gmra.mrb[0].mxu0 %v567
    %v635 = vpop.f32.mrb[0].mxu0
    %v636 = vadd.f32 0.0, %v635
    %v637 = vpop.f32.mrb[0].mxu0
    %638 = vdwg.mxu0
    %v640 = vrot.slane %v636, 5
    %v641 = vrot.slane %v636, 6
    %v644 = vadd.f32 %v140, %v640
    %v645 = vadd.f32 %v145, %v641
    %v646 = vxor.u32 %v644, 2147483648
    %v647 = vxor.u32 %v645, 2147483648
    %v648 = vmul.f32 %v646, 1.442695
    %v649 = vpow.pop %v648
    %v650 = vmul.f32 %v647, 1.442695
    %v651 = vpow.pop %v650
    %v652 = vadd.f32 %v649, 1.0
    %v653 = vadd.f32 %v651, 1.0
    %v654 = vrcp.pop %v652
    %v655 = vmul.f32 1.0, %v654
    %v656 = vrcp.pop %v653
    %v657 = vmul.f32 1.0, %v656
    %v658 = vmul.f32 %v655, 2.0
    %v659 = vmul.f32 %v657, 2.0
    %v660 = vsub.f32 %v658, 1.0
    %v661 = vsub.f32 %v659, 1.0
    %v664 = vrot.slane %v546, 7
    %v665 = vrot.slane %v547, 7
    %v668 = vmul.f32 %v655, %v664
    %v669 = vmul.f32 %v657, %v665
    %672 = vrot.lane.b32.xlu0 %v660, 64
    %v673 = vpop.permute.xlu0 %672
    %674 = vrot.lane.b32.xlu0 %v661, 64
    %v675 = vpop.permute.xlu0 %674
    %v678 = vmul.f32 %v655, %v673
    %v679 = vmul.f32 %v657, %v675
    %682 = vrot.lane.b32.xlu0 %v678, 32
    %v683 = vpop.permute.xlu0 %682
    %684 = vrot.lane.b32.xlu0 %v679, 32
    %v685 = vpop.permute.xlu0 %684
    %v688 = vadd.f32 %v668, %v683
    %v689 = vadd.f32 %v669, %v685
    %v690 = vtanh.pop %v688
    %v691 = vtanh.pop %v689
    %694 = vrot.lane.b32.xlu0 %v690, 64
    %v695 = vpop.permute.xlu0 %694
    %696 = vrot.lane.b32.xlu0 %v691, 64
    %v697 = vpop.permute.xlu0 %696
    %v700 = vmul.f32 %v655, %v695
    %v701 = vmul.f32 %v657, %v697
    %v704 = vrot.slane %v700, 3
    %v705 = vrot.slane %v701, 2
    %v706 = vsel %vm281, %v705, %v704
    %707 = vrot.lane.b32.xlu0 %v706, 32
    %v708 = vpop.permute.xlu0 %707
    %v709 = vsel %vm148, %v708, 0
    %711 = vmatprep.subr.mxu0 0.0
    %712 = vmatpush1.msra.mxu0 %v23
    %713 = vmatprep.subr.mxu0 0.0
    %714 = vmatpush1.msra.mxu0 %v26
    %715 = vmatprep.subr.mxu0 0.0
    %716 = vmatpush1.msra.mxu0 %v29
    %717 = vmatprep.subr.mxu0 0.0
    %718 = vmatpush1.msra.mxu0 %v32
    %719 = vmatprep.subr.mxu0 0.0
    %720 = vmatpush1.msra.mxu0 0.0
    %721 = vmatprep.subr.mxu0 0.0
    %722 = vmatpush1.msra.mxu0 0.0
    %723 = vmatprep.subr.mxu0 0.0
    %724 = vmatpush1.msra.mxu0 0.0
    %725 = vmatprep.subr.mxu0 0.0
    %726 = vmatpush1.msra.mxu0 0.0
    %727 = vmatprep.subr.mxu0 0.0
    %728 = vmatpush1.msra.mxu0 0.0
    %729 = vmatprep.subr.mxu0 0.0
    %730 = vmatpush1.msra.mxu0 0.0
    %731 = vmatprep.subr.mxu0 0.0
    %732 = vmatpush1.msra.mxu0 0.0
    %733 = vmatprep.subr.mxu0 0.0
    %734 = vmatpush1.msra.mxu0 0.0
    %735 = vmatprep.subr.mxu0 0.0
    %736 = vmatpush1.msra.mxu0 0.0
    %737 = vmatprep.subr.mxu0 0.0
    %738 = vmatpush1.msra.mxu0 0.0
    %739 = vmatprep.subr.mxu0 0.0
    %740 = vmatpush1.msra.mxu0 0.0
    %741 = vmatprep.subr.mxu0 0.0
    %742 = vmatpush1.msra.mxu0 0.0
    %743 = vmatprep.subr.mxu0 0.0
    %744 = vmatpush1.msra.mxu0 0.0
    %745 = vmatprep.subr.mxu0 0.0
    %746 = vmatpush1.msra.mxu0 0.0
    %747 = vmatprep.subr.mxu0 0.0
    %748 = vmatpush1.msra.mxu0 0.0
    %749 = vmatprep.subr.mxu0 0.0
    %750 = vmatpush1.msra.mxu0 0.0
    %751 = vmatprep.subr.mxu0 0.0
    %752 = vmatpush1.msra.mxu0 0.0
    %753 = vmatprep.subr.mxu0 0.0
    %754 = vmatpush1.msra.mxu0 0.0
    %755 = vmatprep.subr.mxu0 0.0
    %756 = vmatpush1.msra.mxu0 0.0
    %757 = vmatprep.subr.mxu0 0.0
    %758 = vmatpush1.msra.mxu0 0.0
    %759 = vmatprep.subr.mxu0 0.0
    %760 = vmatpush1.msra.mxu0 0.0
    %761 = vmatprep.subr.mxu0 0.0
    %762 = vmatpush1.msra.mxu0 0.0
    %763 = vmatprep.subr.mxu0 0.0
    %764 = vmatpush1.msra.mxu0 0.0
    %765 = vmatprep.subr.mxu0 0.0
    %766 = vmatpush1.msra.mxu0 0.0
    %767 = vmatprep.subr.mxu0 0.0
    %768 = vmatpush1.msra.mxu0 0.0
    %769 = vmatprep.subr.mxu0 0.0
    %770 = vmatpush1.msra.mxu0 0.0
    %771 = vmatprep.subr.mxu0 0.0
    %772 = vmatpush1.msra.mxu0 0.0
    %773 = vmatprep.subr.mxu0 0.0
    %774 = vmatpush1.msra.mxu0 0.0
    %775 = vmatprep.mubr.f32.mxu0 0.0
    %776 = vmatmul.mubr.f32.gmra.mrb[0].mxu0 %v709
    %v777 = vpop.f32.mrb[0].mxu0
    %v778 = vadd.f32 0.0, %v777
    %v779 = vpop.f32.mrb[0].mxu0
    %780 = vdwg.mxu0
    %v782 = vrot.slane %v778, 4
    %v783 = vrot.slane %v778, 5
    %v786 = vadd.f32 %v140, %v782
    %v787 = vadd.f32 %v145, %v783
    %v788 = vxor.u32 %v786, 2147483648
    %v789 = vxor.u32 %v787, 2147483648
    %v790 = vmul.f32 %v788, 1.442695
    %v791 = vpow.pop %v790
    %v792 = vmul.f32 %v789, 1.442695
    %v793 = vpow.pop %v792
    %v794 = vadd.f32 %v791, 1.0
    %v795 = vadd.f32 %v793, 1.0
    %v796 = vrcp.pop %v794
    %v797 = vmul.f32 1.0, %v796
    %v798 = vrcp.pop %v795
    %v799 = vmul.f32 1.0, %v798
    %v800 = vmul.f32 %v797, 2.0
    %v801 = vmul.f32 %v799, 2.0
    %v802 = vsub.f32 %v800, 1.0
    %v803 = vsub.f32 %v801, 1.0
    %v806 = vrot.slane %v688, 7
    %v807 = vrot.slane %v689, 7
    %v810 = vmul.f32 %v797, %v806
    %v811 = vmul.f32 %v799, %v807
    %814 = vrot.lane.b32.xlu0 %v802, 64
    %v815 = vpop.permute.xlu0 %814
    %816 = vrot.lane.b32.xlu0 %v803, 64
    %v817 = vpop.permute.xlu0 %816
    %v820 = vmul.f32 %v797, %v815
    %v821 = vmul.f32 %v799, %v817
    %824 = vrot.lane.b32.xlu0 %v820, 32
    %v825 = vpop.permute.xlu0 %824
    %826 = vrot.lane.b32.xlu0 %v821, 32
    %v827 = vpop.permute.xlu0 %826
    %v830 = vadd.f32 %v810, %v825
    %v831 = vadd.f32 %v811, %v827
    %v832 = vtanh.pop %v830
    %v833 = vtanh.pop %v831
    %836 = vrot.lane.b32.xlu0 %v832, 64
    %v837 = vpop.permute.xlu0 %836
    %838 = vrot.lane.b32.xlu0 %v833, 64
    %v839 = vpop.permute.xlu0 %838
    %v842 = vmul.f32 %v797, %v837
    %v843 = vmul.f32 %v799, %v839
    %v846 = vrot.slane %v842, 4
    %v847 = vrot.slane %v843, 3
    %v848 = vsel %vm281, %v847, %v846
    %849 = vrot.lane.b32.xlu0 %v848, 32
    %v850 = vpop.permute.xlu0 %849
    %v851 = vsel %vm148, %v850, 0
    %853 = vmatprep.subr.mxu0 0.0
    %854 = vmatpush1.msra.mxu0 %v23
    %855 = vmatprep.subr.mxu0 0.0
    %856 = vmatpush1.msra.mxu0 %v26
    %857 = vmatprep.subr.mxu0 0.0
    %858 = vmatpush1.msra.mxu0 %v29
    %859 = vmatprep.subr.mxu0 0.0
    %860 = vmatpush1.msra.mxu0 %v32
    %861 = vmatprep.subr.mxu0 0.0
    %862 = vmatpush1.msra.mxu0 0.0
    %863 = vmatprep.subr.mxu0 0.0
    %864 = vmatpush1.msra.mxu0 0.0
    %865 = vmatprep.subr.mxu0 0.0
    %866 = vmatpush1.msra.mxu0 0.0
    %867 = vmatprep.subr.mxu0 0.0
    %868 = vmatpush1.msra.mxu0 0.0
    %869 = vmatprep.subr.mxu0 0.0
    %870 = vmatpush1.msra.mxu0 0.0
    %871 = vmatprep.subr.mxu0 0.0
    %872 = vmatpush1.msra.mxu0 0.0
    %873 = vmatprep.subr.mxu0 0.0
    %874 = vmatpush1.msra.mxu0 0.0
    %875 = vmatprep.subr.mxu0 0.0
    %876 = vmatpush1.msra.mxu0 0.0
    %877 = vmatprep.subr.mxu0 0.0
    %878 = vmatpush1.msra.mxu0 0.0
    %879 = vmatprep.subr.mxu0 0.0
    %880 = vmatpush1.msra.mxu0 0.0
    %881 = vmatprep.subr.mxu0 0.0
    %882 = vmatpush1.msra.mxu0 0.0
    %883 = vmatprep.subr.mxu0 0.0
    %884 = vmatpush1.msra.mxu0 0.0
    %885 = vmatprep.subr.mxu0 0.0
    %886 = vmatpush1.msra.mxu0 0.0
    %887 = vmatprep.subr.mxu0 0.0
    %888 = vmatpush1.msra.mxu0 0.0
    %889 = vmatprep.subr.mxu0 0.0
    %890 = vmatpush1.msra.mxu0 0.0
    %891 = vmatprep.subr.mxu0 0.0
    %892 = vmatpush1.msra.mxu0 0.0
    %893 = vmatprep.subr.mxu0 0.0
    %894 = vmatpush1.msra.mxu0 0.0
    %895 = vmatprep.subr.mxu0 0.0
    %896 = vmatpush1.msra.mxu0 0.0
    %897 = vmatprep.subr.mxu0 0.0
    %898 = vmatpush1.msra.mxu0 0.0
    %899 = vmatprep.subr.mxu0 0.0
    %900 = vmatpush1.msra.mxu0 0.0
    %901 = vmatprep.subr.mxu0 0.0
    %902 = vmatpush1.msra.mxu0 0.0
    %903 = vmatprep.subr.mxu0 0.0
    %904 = vmatpush1.msra.mxu0 0.0
    %905 = vmatprep.subr.mxu0 0.0
    %906 = vmatpush1.msra.mxu0 0.0
    %907 = vmatprep.subr.mxu0 0.0
    %908 = vmatpush1.msra.mxu0 0.0
    %909 = vmatprep.subr.mxu0 0.0
    %910 = vmatpush1.msra.mxu0 0.0
    %911 = vmatprep.subr.mxu0 0.0
    %912 = vmatpush1.msra.mxu0 0.0
    %913 = vmatprep.subr.mxu0 0.0
    %914 = vmatpush1.msra.mxu0 0.0
    %915 = vmatprep.subr.mxu0 0.0
    %916 = vmatpush1.msra.mxu0 0.0
    %917 = vmatprep.mubr.f32.mxu0 0.0
    %918 = vmatmul.mubr.f32.gmra.mrb[0].mxu0 %v851
    %v919 = vpop.f32.mrb[0].mxu0
    %v920 = vadd.f32 0.0, %v919
    %v921 = vpop.f32.mrb[0].mxu0
    %922 = vdwg.mxu0
    %v924 = vrot.slane %v920, 3
    %v925 = vrot.slane %v920, 4
    %v928 = vadd.f32 %v140, %v924
    %v929 = vadd.f32 %v145, %v925
    %v930 = vxor.u32 %v928, 2147483648
    %v931 = vxor.u32 %v929, 2147483648
    %v932 = vmul.f32 %v930, 1.442695
    %v933 = vpow.pop %v932
    %v934 = vmul.f32 %v931, 1.442695
    %v935 = vpow.pop %v934
    %v936 = vadd.f32 %v933, 1.0
    %v937 = vadd.f32 %v935, 1.0
    %v938 = vrcp.pop %v936
    %v939 = vmul.f32 1.0, %v938
    %v940 = vrcp.pop %v937
    %v941 = vmul.f32 1.0, %v940
    %v942 = vmul.f32 %v939, 2.0
    %v943 = vmul.f32 %v941, 2.0
    %v944 = vsub.f32 %v942, 1.0
    %v945 = vsub.f32 %v943, 1.0
    %v948 = vrot.slane %v830, 7
    %v949 = vrot.slane %v831, 7
    %v952 = vmul.f32 %v939, %v948
    %v953 = vmul.f32 %v941, %v949
    %956 = vrot.lane.b32.xlu0 %v944, 64
    %v957 = vpop.permute.xlu0 %956
    %958 = vrot.lane.b32.xlu0 %v945, 64
    %v959 = vpop.permute.xlu0 %958
    %v962 = vmul.f32 %v939, %v957
    %v963 = vmul.f32 %v941, %v959
    %966 = vrot.lane.b32.xlu0 %v962, 32
    %v967 = vpop.permute.xlu0 %966
    %968 = vrot.lane.b32.xlu0 %v963, 32
    %v969 = vpop.permute.xlu0 %968
    %v972 = vadd.f32 %v952, %v967
    %v973 = vadd.f32 %v953, %v969
    %v974 = vtanh.pop %v972
    %v975 = vtanh.pop %v973
    %978 = vrot.lane.b32.xlu0 %v974, 64
    %v979 = vpop.permute.xlu0 %978
    %980 = vrot.lane.b32.xlu0 %v975, 64
    %v981 = vpop.permute.xlu0 %980
    %v984 = vmul.f32 %v939, %v979
    %v985 = vmul.f32 %v941, %v981
    %v988 = vrot.slane %v984, 5
    %v989 = vrot.slane %v985, 4
    %v990 = vsel %vm281, %v989, %v988
    %991 = vrot.lane.b32.xlu0 %v990, 32
    %v992 = vpop.permute.xlu0 %991
    %v993 = vsel %vm148, %v992, 0
    %995 = vmatprep.subr.mxu0 0.0
    %996 = vmatpush1.msra.mxu0 %v23
    %997 = vmatprep.subr.mxu0 0.0
    %998 = vmatpush1.msra.mxu0 %v26
    %999 = vmatprep.subr.mxu0 0.0
    %1000 = vmatpush1.msra.mxu0 %v29
    %1001 = vmatprep.subr.mxu0 0.0
    %1002 = vmatpush1.msra.mxu0 %v32
    %1003 = vmatprep.subr.mxu0 0.0
    %1004 = vmatpush1.msra.mxu0 0.0
    %1005 = vmatprep.subr.mxu0 0.0
    %1006 = vmatpush1.msra.mxu0 0.0
    %1007 = vmatprep.subr.mxu0 0.0
    %1008 = vmatpush1.msra.mxu0 0.0
    %1009 = vmatprep.subr.mxu0 0.0
    %1010 = vmatpush1.msra.mxu0 0.0
    %1011 = vmatprep.subr.mxu0 0.0
    %1012 = vmatpush1.msra.mxu0 0.0
    %1013 = vmatprep.subr.mxu0 0.0
    %1014 = vmatpush1.msra.mxu0 0.0
    %1015 = vmatprep.subr.mxu0 0.0
    %1016 = vmatpush1.msra.mxu0 0.0
    %1017 = vmatprep.subr.mxu0 0.0
    %1018 = vmatpush1.msra.mxu0 0.0
    %1019 = vmatprep.subr.mxu0 0.0
    %1020 = vmatpush1.msra.mxu0 0.0
    %1021 = vmatprep.subr.mxu0 0.0
    %1022 = vmatpush1.msra.mxu0 0.0
    %1023 = vmatprep.subr.mxu0 0.0
    %1024 = vmatpush1.msra.mxu0 0.0
    %1025 = vmatprep.subr.mxu0 0.0
    %1026 = vmatpush1.msra.mxu0 0.0
    %1027 = vmatprep.subr.mxu0 0.0
    %1028 = vmatpush1.msra.mxu0 0.0
    %1029 = vmatprep.subr.mxu0 0.0
    %1030 = vmatpush1.msra.mxu0 0.0
    %1031 = vmatprep.subr.mxu0 0.0
    %1032 = vmatpush1.msra.mxu0 0.0
    %1033 = vmatprep.subr.mxu0 0.0
    %1034 = vmatpush1.msra.mxu0 0.0
    %1035 = vmatprep.subr.mxu0 0.0
    %1036 = vmatpush1.msra.mxu0 0.0
    %1037 = vmatprep.subr.mxu0 0.0
    %1038 = vmatpush1.msra.mxu0 0.0
    %1039 = vmatprep.subr.mxu0 0.0
    %1040 = vmatpush1.msra.mxu0 0.0
    %1041 = vmatprep.subr.mxu0 0.0
    %1042 = vmatpush1.msra.mxu0 0.0
    %1043 = vmatprep.subr.mxu0 0.0
    %1044 = vmatpush1.msra.mxu0 0.0
    %1045 = vmatprep.subr.mxu0 0.0
    %1046 = vmatpush1.msra.mxu0 0.0
    %1047 = vmatprep.subr.mxu0 0.0
    %1048 = vmatpush1.msra.mxu0 0.0
    %1049 = vmatprep.subr.mxu0 0.0
    %1050 = vmatpush1.msra.mxu0 0.0
    %1051 = vmatprep.subr.mxu0 0.0
    %1052 = vmatpush1.msra.mxu0 0.0
    %1053 = vmatprep.subr.mxu0 0.0
    %1054 = vmatpush1.msra.mxu0 0.0
    %1055 = vmatprep.subr.mxu0 0.0
    %1056 = vmatpush1.msra.mxu0 0.0
    %1057 = vmatprep.subr.mxu0 0.0
    %1058 = vmatpush1.msra.mxu0 0.0
    %1059 = vmatprep.mubr.f32.mxu0 0.0
    %1060 = vmatmul.mubr.f32.gmra.mrb[0].mxu0 %v993
    %v1061 = vpop.f32.mrb[0].mxu0
    %v1062 = vadd.f32 0.0, %v1061
    %v1063 = vpop.f32.mrb[0].mxu0
    %1064 = vdwg.mxu0
    %v1066 = vrot.slane %v1062, 2
    %v1067 = vrot.slane %v1062, 3
    %v1070 = vadd.f32 %v140, %v1066
    %v1071 = vadd.f32 %v145, %v1067
    %v1072 = vxor.u32 %v1070, 2147483648
    %v1073 = vxor.u32 %v1071, 2147483648
    %v1074 = vmul.f32 %v1072, 1.442695
    %v1075 = vpow.pop %v1074
    %v1076 = vmul.f32 %v1073, 1.442695
    %v1077 = vpow.pop %v1076
    %v1078 = vadd.f32 %v1075, 1.0
    %v1079 = vadd.f32 %v1077, 1.0
    %v1080 = vrcp.pop %v1078
    %v1081 = vmul.f32 1.0, %v1080
    %v1082 = vrcp.pop %v1079
    %v1083 = vmul.f32 1.0, %v1082
    %v1084 = vmul.f32 %v1081, 2.0
    %v1085 = vmul.f32 %v1083, 2.0
    %v1086 = vsub.f32 %v1084, 1.0
    %v1087 = vsub.f32 %v1085, 1.0
    %v1090 = vrot.slane %v972, 7
    %v1091 = vrot.slane %v973, 7
    %v1094 = vmul.f32 %v1081, %v1090
    %v1095 = vmul.f32 %v1083, %v1091
    %1098 = vrot.lane.b32.xlu0 %v1086, 64
    %v1099 = vpop.permute.xlu0 %1098
    %1100 = vrot.lane.b32.xlu0 %v1087, 64
    %v1101 = vpop.permute.xlu0 %1100
    %v1104 = vmul.f32 %v1081, %v1099
    %v1105 = vmul.f32 %v1083, %v1101
    %1108 = vrot.lane.b32.xlu0 %v1104, 32
    %v1109 = vpop.permute.xlu0 %1108
    %1110 = vrot.lane.b32.xlu0 %v1105, 32
    %v1111 = vpop.permute.xlu0 %1110
    %v1114 = vadd.f32 %v1094, %v1109
    %v1115 = vadd.f32 %v1095, %v1111
    %v1116 = vtanh.pop %v1114
    %v1117 = vtanh.pop %v1115
    %1120 = vrot.lane.b32.xlu0 %v1116, 64
    %v1121 = vpop.permute.xlu0 %1120
    %1122 = vrot.lane.b32.xlu0 %v1117, 64
    %v1123 = vpop.permute.xlu0 %1122
    %v1126 = vmul.f32 %v1081, %v1121
    %v1127 = vmul.f32 %v1083, %v1123
    %v1130 = vrot.slane %v1126, 6
    %v1131 = vrot.slane %v1127, 5
    %v1132 = vsel %vm281, %v1131, %v1130
    %1133 = vrot.lane.b32.xlu0 %v1132, 32
    %v1134 = vpop.permute.xlu0 %1133
    %v1135 = vsel %vm148, %v1134, 0
    %1137 = vmatprep.subr.mxu0 0.0
    %1138 = vmatpush1.msra.mxu0 %v23
    %1139 = vmatprep.subr.mxu0 0.0
    %1140 = vmatpush1.msra.mxu0 %v26
    %1141 = vmatprep.subr.mxu0 0.0
    %1142 = vmatpush1.msra.mxu0 %v29
    %1143 = vmatprep.subr.mxu0 0.0
    %1144 = vmatpush1.msra.mxu0 %v32
    %1145 = vmatprep.subr.mxu0 0.0
    %1146 = vmatpush1.msra.mxu0 0.0
    %1147 = vmatprep.subr.mxu0 0.0
    %1148 = vmatpush1.msra.mxu0 0.0
    %1149 = vmatprep.subr.mxu0 0.0
    %1150 = vmatpush1.msra.mxu0 0.0
    %1151 = vmatprep.subr.mxu0 0.0
    %1152 = vmatpush1.msra.mxu0 0.0
    %1153 = vmatprep.subr.mxu0 0.0
    %1154 = vmatpush1.msra.mxu0 0.0
    %1155 = vmatprep.subr.mxu0 0.0
    %1156 = vmatpush1.msra.mxu0 0.0
    %1157 = vmatprep.subr.mxu0 0.0
    %1158 = vmatpush1.msra.mxu0 0.0
    %1159 = vmatprep.subr.mxu0 0.0
    %1160 = vmatpush1.msra.mxu0 0.0
    %1161 = vmatprep.subr.mxu0 0.0
    %1162 = vmatpush1.msra.mxu0 0.0
    %1163 = vmatprep.subr.mxu0 0.0
    %1164 = vmatpush1.msra.mxu0 0.0
    %1165 = vmatprep.subr.mxu0 0.0
    %1166 = vmatpush1.msra.mxu0 0.0
    %1167 = vmatprep.subr.mxu0 0.0
    %1168 = vmatpush1.msra.mxu0 0.0
    %1169 = vmatprep.subr.mxu0 0.0
    %1170 = vmatpush1.msra.mxu0 0.0
    %1171 = vmatprep.subr.mxu0 0.0
    %1172 = vmatpush1.msra.mxu0 0.0
    %1173 = vmatprep.subr.mxu0 0.0
    %1174 = vmatpush1.msra.mxu0 0.0
    %1175 = vmatprep.subr.mxu0 0.0
    %1176 = vmatpush1.msra.mxu0 0.0
    %1177 = vmatprep.subr.mxu0 0.0
    %1178 = vmatpush1.msra.mxu0 0.0
    %1179 = vmatprep.subr.mxu0 0.0
    %1180 = vmatpush1.msra.mxu0 0.0
    %1181 = vmatprep.subr.mxu0 0.0
    %1182 = vmatpush1.msra.mxu0 0.0
    %1183 = vmatprep.subr.mxu0 0.0
    %1184 = vmatpush1.msra.mxu0 0.0
    %1185 = vmatprep.subr.mxu0 0.0
    %1186 = vmatpush1.msra.mxu0 0.0
    %1187 = vmatprep.subr.mxu0 0.0
    %1188 = vmatpush1.msra.mxu0 0.0
    %1189 = vmatprep.subr.mxu0 0.0
    %1190 = vmatpush1.msra.mxu0 0.0
    %1191 = vmatprep.subr.mxu0 0.0
    %1192 = vmatpush1.msra.mxu0 0.0
    %1193 = vmatprep.subr.mxu0 0.0
    %1194 = vmatpush1.msra.mxu0 0.0
    %1195 = vmatprep.subr.mxu0 0.0
    %1196 = vmatpush1.msra.mxu0 0.0
    %1197 = vmatprep.subr.mxu0 0.0
    %1198 = vmatpush1.msra.mxu0 0.0
    %1199 = vmatprep.subr.mxu0 0.0
    %1200 = vmatpush1.msra.mxu0 0.0
    %1201 = vmatprep.mubr.f32.mxu0 0.0
    %1202 = vmatmul.mubr.f32.gmra.mrb[0].mxu0 %v1135
    %v1203 = vpop.f32.mrb[0].mxu0
    %v1204 = vadd.f32 0.0, %v1203
    %v1205 = vpop.f32.mrb[0].mxu0
    %1206 = vdwg.mxu0
    %v1208 = vrot.slane %v1204, 1
    %v1209 = vrot.slane %v1204, 2
    %v1212 = vadd.f32 %v140, %v1208
    %v1213 = vadd.f32 %v145, %v1209
    %v1214 = vxor.u32 %v1212, 2147483648
    %v1215 = vxor.u32 %v1213, 2147483648
    %v1216 = vmul.f32 %v1214, 1.442695
    %v1217 = vpow.pop %v1216
    %v1218 = vmul.f32 %v1215, 1.442695
    %v1219 = vpow.pop %v1218
    %v1220 = vadd.f32 %v1217, 1.0
    %v1221 = vadd.f32 %v1219, 1.0
    %v1222 = vrcp.pop %v1220
    %v1223 = vmul.f32 1.0, %v1222
    %v1224 = vrcp.pop %v1221
    %v1225 = vmul.f32 1.0, %v1224
    %v1226 = vmul.f32 %v1223, 2.0
    %v1227 = vmul.f32 %v1225, 2.0
    %v1228 = vsub.f32 %v1226, 1.0
    %v1229 = vsub.f32 %v1227, 1.0
    %v1232 = vrot.slane %v1114, 7
    %v1233 = vrot.slane %v1115, 7
    %v1236 = vmul.f32 %v1223, %v1232
    %v1237 = vmul.f32 %v1225, %v1233
    %1240 = vrot.lane.b32.xlu0 %v1228, 64
    %v1241 = vpop.permute.xlu0 %1240
    %1242 = vrot.lane.b32.xlu0 %v1229, 64
    %v1243 = vpop.permute.xlu0 %1242
    %v1246 = vmul.f32 %v1223, %v1241
    %v1247 = vmul.f32 %v1225, %v1243
    %1250 = vrot.lane.b32.xlu0 %v1246, 32
    %v1251 = vpop.permute.xlu0 %1250
    %1252 = vrot.lane.b32.xlu0 %v1247, 32
    %v1253 = vpop.permute.xlu0 %1252
    %v1256 = vadd.f32 %v1236, %v1251
    %v1257 = vadd.f32 %v1237, %v1253
    %v1258 = vtanh.pop %v1256
    %v1259 = vtanh.pop %v1257
    %1262 = vrot.lane.b32.xlu0 %v1258, 64
    %v1263 = vpop.permute.xlu0 %1262
    %1264 = vrot.lane.b32.xlu0 %v1259, 64
    %v1265 = vpop.permute.xlu0 %1264
    %v1268 = vmul.f32 %v1223, %v1263
    %v1269 = vmul.f32 %v1225, %v1265
    %v1272 = vrot.slane %v1268, 7
    %v1273 = vrot.slane %v1269, 6
    %v1274 = vsel %vm281, %v1273, %v1272
    %1275 = vrot.lane.b32.xlu0 %v1274, 32
    %v1276 = vpop.permute.xlu0 %1275
    %v1277 = vsel %vm148, %v1276, 0
    %1279 = vmatprep.subr.mxu0 0.0
    %1280 = vmatpush1.msra.mxu0 %v24
    %1281 = vmatprep.subr.mxu0 0.0
    %1282 = vmatpush1.msra.mxu0 %v27
    %1283 = vmatprep.subr.mxu0 0.0
    %1284 = vmatpush1.msra.mxu0 %v30
    %1285 = vmatprep.subr.mxu0 0.0
    %1286 = vmatpush1.msra.mxu0 %v33
    %1287 = vmatprep.subr.mxu0 0.0
    %1288 = vmatpush1.msra.mxu0 0.0
    %1289 = vmatprep.subr.mxu0 0.0
    %1290 = vmatpush1.msra.mxu0 0.0
    %1291 = vmatprep.subr.mxu0 0.0
    %1292 = vmatpush1.msra.mxu0 0.0
    %1293 = vmatprep.subr.mxu0 0.0
    %1294 = vmatpush1.msra.mxu0 0.0
    %1295 = vmatprep.subr.mxu0 0.0
    %1296 = vmatpush1.msra.mxu0 0.0
    %1297 = vmatprep.subr.mxu0 0.0
    %1298 = vmatpush1.msra.mxu0 0.0
    %1299 = vmatprep.subr.mxu0 0.0
    %1300 = vmatpush1.msra.mxu0 0.0
    %1301 = vmatprep.subr.mxu0 0.0
    %1302 = vmatpush1.msra.mxu0 0.0
    %1303 = vmatprep.subr.mxu0 0.0
    %1304 = vmatpush1.msra.mxu0 0.0
    %1305 = vmatprep.subr.mxu0 0.0
    %1306 = vmatpush1.msra.mxu0 0.0
    %1307 = vmatprep.subr.mxu0 0.0
    %1308 = vmatpush1.msra.mxu0 0.0
    %1309 = vmatprep.subr.mxu0 0.0
    %1310 = vmatpush1.msra.mxu0 0.0
    %1311 = vmatprep.subr.mxu0 0.0
    %1312 = vmatpush1.msra.mxu0 0.0
    %1313 = vmatprep.subr.mxu0 0.0
    %1314 = vmatpush1.msra.mxu0 0.0
    %1315 = vmatprep.subr.mxu0 0.0
    %1316 = vmatpush1.msra.mxu0 0.0
    %1317 = vmatprep.subr.mxu0 0.0
    %1318 = vmatpush1.msra.mxu0 0.0
    %1319 = vmatprep.subr.mxu0 0.0
    %1320 = vmatpush1.msra.mxu0 0.0
    %1321 = vmatprep.subr.mxu0 0.0
    %1322 = vmatpush1.msra.mxu0 0.0
    %1323 = vmatprep.subr.mxu0 0.0
    %1324 = vmatpush1.msra.mxu0 0.0
    %1325 = vmatprep.subr.mxu0 0.0
    %1326 = vmatpush1.msra.mxu0 0.0
    %1327 = vmatprep.subr.mxu0 0.0
    %1328 = vmatpush1.msra.mxu0 0.0
    %1329 = vmatprep.subr.mxu0 0.0
    %1330 = vmatpush1.msra.mxu0 0.0
    %1331 = vmatprep.subr.mxu0 0.0
    %1332 = vmatpush1.msra.mxu0 0.0
    %1333 = vmatprep.subr.mxu0 0.0
    %1334 = vmatpush1.msra.mxu0 0.0
    %1335 = vmatprep.subr.mxu0 0.0
    %1336 = vmatpush1.msra.mxu0 0.0
    %1337 = vmatprep.subr.mxu0 0.0
    %1338 = vmatpush1.msra.mxu0 0.0
    %1339 = vmatprep.subr.mxu0 0.0
    %1340 = vmatpush1.msra.mxu0 0.0
    %1341 = vmatprep.subr.mxu0 0.0
    %1342 = vmatpush1.msra.mxu0 0.0
    %1343 = vmatprep.mubr.f32.mxu0 0.0
    %1344 = vmatmul.mubr.f32.gmra.mrb[0].mxu0 %v1277
    %v1345 = vpop.f32.mrb[0].mxu0
    %v1346 = vadd.f32 %v39, %v1345
    %v1347 = vpop.f32.mrb[0].mxu0
    %1348 = vdwg.mxu0
    %v1349 = vxor.u32 %v1346, 2147483648
    %v1350 = vmul.f32 %v1349, 1.442695
    %v1351 = vpow.pop %v1350
    %v1352 = vadd.f32 %v1351, 1.0
    %v1353 = vrcp.pop %v1352
    %v1354 = vmul.f32 1.0, %v1353
    %v1355 = vmul.f32 %v1354, 2.0
    %v1356 = vsub.f32 %v1355, 1.0
    %v1359 = vrot.slane %v1256, 7
    %v1360 = vrot.slane %v1257, 6
    %v1361 = vsel %vm281, %v1360, %v1359
    %v1363 = vmul.f32 %v1354, %v1361
    %1365 = vrot.lane.b32.xlu0 %v1356, 64
    %v1366 = vpop.permute.xlu0 %1365
    %v1368 = vmul.f32 %v1354, %v1366
    %1370 = vrot.lane.b32.xlu0 %v1368, 32
    %v1371 = vpop.permute.xlu0 %1370
    %v1373 = vadd.f32 %v1363, %v1371
    %v1374 = vtanh.pop %v1373
    %1376 = vrot.lane.b32.xlu0 %v1374, 64
    %v1377 = vpop.permute.xlu0 %1376
    %v1379 = vmul.f32 %v1354, %v1377
    %v1382 = vunpack.c.l.s4 1966171168
    %v1383 = vunpack.c.0.s8 %v1382
    %v1384 = vlaneseq
    %v1385 = vshrl.u32 %v1384, 7
    %v1386 = vsub.s32 %v1383, %v1385
    %v1387 = vrot.slane %v1379, %v1386
    %v1388 = vcombine.high %v1387, %v1387
    %v1390 = vunpack.c.l.s4 1966171168
    %v1391 = vunpack.c.0.s8 %v1390
    %v1392 = vlaneseq
    %v1393 = vshrl.u32 %v1392, 7
    %v1394 = vsub.s32 %v1391, %v1393
    %v1395 = vrot.slane %v1387, %v1394
    %v1397 = vunpack.c.l.s4 1966171168
    %v1398 = vunpack.c.0.s8 %v1397
    %v1399 = vlaneseq
    %v1400 = vshrl.u32 %v1399, 7
    %v1401 = vsub.s32 %v1398, %v1400
    %v1402 = vrot.slane %v1388, %v1401
    %v1403 = vlaneseq
    %v1404 = vshrl.u32 %v1403, 7
    %v1405 = vsub.s32 0, %v1404
    %v1406 = vrot.slane %v1395, %v1405
    %v1407 = vlaneseq
    %v1408 = vshrl.u32 %v1407, 7
    %v1409 = vsub.s32 0, %v1408
    %v1410 = vrot.slane %v1402, %v1409
    %1411 = vrot.lane.b32.xlu0 %v1406, 32
    %v1412 = vpop.permute.xlu0 %1411
    %1413 = vrot.lane.b32.xlu0 %v1410, 32
    %v1414 = vpop.permute.xlu0 %1413
    %vm1417 = vcmask 253952
    %1418 = vst.msk [vmem:[#allocation2] sm:$0x1] %vm1417, %v1412
    %1419 = vst.msk [vmem:[#allocation2 + $0x8] sm:$0x1] %vm1417, %v1414
    %1420 = vrot.lane.b32.xlu0 %v1379, 32
    %v1421 = vpop.permute.xlu0 %1420
    %v1422 = vsel %vm148, %v1421, 0
    %1424 = vmatprep.subr.mxu0 0.0
    %1425 = vmatpush1.msra.mxu0 %v25
    %1426 = vmatprep.subr.mxu0 0.0
    %1427 = vmatpush1.msra.mxu0 %v28
    %1428 = vmatprep.subr.mxu0 0.0
    %1429 = vmatpush1.msra.mxu0 %v31
    %1430 = vmatprep.subr.mxu0 0.0
    %1431 = vmatpush1.msra.mxu0 %v34
    %1432 = vmatprep.subr.mxu0 0.0
    %1433 = vmatpush1.msra.mxu0 0.0
    %1434 = vmatprep.subr.mxu0 0.0
    %1435 = vmatpush1.msra.mxu0 0.0
    %1436 = vmatprep.subr.mxu0 0.0
    %1437 = vmatpush1.msra.mxu0 0.0
    %1438 = vmatprep.subr.mxu0 0.0
    %1439 = vmatpush1.msra.mxu0 0.0
    %1440 = vmatprep.subr.mxu0 0.0
    %1441 = vmatpush1.msra.mxu0 0.0
    %1442 = vmatprep.subr.mxu0 0.0
    %1443 = vmatpush1.msra.mxu0 0.0
    %1444 = vmatprep.subr.mxu0 0.0
    %1445 = vmatpush1.msra.mxu0 0.0
    %1446 = vmatprep.subr.mxu0 0.0
    %1447 = vmatpush1.msra.mxu0 0.0
    %1448 = vmatprep.subr.mxu0 0.0
    %1449 = vmatpush1.msra.mxu0 0.0
    %1450 = vmatprep.subr.mxu0 0.0
    %1451 = vmatpush1.msra.mxu0 0.0
    %1452 = vmatprep.subr.mxu0 0.0
    %1453 = vmatpush1.msra.mxu0 0.0
    %1454 = vmatprep.subr.mxu0 0.0
    %1455 = vmatpush1.msra.mxu0 0.0
    %1456 = vmatprep.subr.mxu0 0.0
    %1457 = vmatpush1.msra.mxu0 0.0
    %1458 = vmatprep.subr.mxu0 0.0
    %1459 = vmatpush1.msra.mxu0 0.0
    %1460 = vmatprep.subr.mxu0 0.0
    %1461 = vmatpush1.msra.mxu0 0.0
    %1462 = vmatprep.subr.mxu0 0.0
    %1463 = vmatpush1.msra.mxu0 0.0
    %1464 = vmatprep.subr.mxu0 0.0
    %1465 = vmatpush1.msra.mxu0 0.0
    %1466 = vmatprep.subr.mxu0 0.0
    %1467 = vmatpush1.msra.mxu0 0.0
    %1468 = vmatprep.subr.mxu0 0.0
    %1469 = vmatpush1.msra.mxu0 0.0
    %1470 = vmatprep.subr.mxu0 0.0
    %1471 = vmatpush1.msra.mxu0 0.0
    %1472 = vmatprep.subr.mxu0 0.0
    %1473 = vmatpush1.msra.mxu0 0.0
    %1474 = vmatprep.subr.mxu0 0.0
    %1475 = vmatpush1.msra.mxu0 0.0
    %1476 = vmatprep.subr.mxu0 0.0
    %1477 = vmatpush1.msra.mxu0 0.0
    %1478 = vmatprep.subr.mxu0 0.0
    %1479 = vmatpush1.msra.mxu0 0.0
    %1480 = vmatprep.subr.mxu0 0.0
    %1481 = vmatpush1.msra.mxu0 0.0
    %1482 = vmatprep.subr.mxu0 0.0
    %1483 = vmatpush1.msra.mxu0 0.0
    %1484 = vmatprep.subr.mxu0 0.0
    %1485 = vmatpush1.msra.mxu0 0.0
    %1486 = vmatprep.subr.mxu0 0.0
    %1487 = vmatpush1.msra.mxu0 0.0
    %1488 = vmatprep.mubr.f32.mxu0 0.0
    %1489 = vmatmul.mubr.f32.gmra.mrb[0].mxu0 %v1422
    %v1490 = vpop.f32.mrb[0].mxu0
    %v1491 = vadd.f32 %v43, %v1490
    %v1492 = vpop.f32.mrb[0].mxu0
    %1493 = vdwg.mxu0
    %v1494 = vxor.u32 %v1491, 2147483648
    %v1495 = vmul.f32 %v1494, 1.442695
    %v1496 = vpow.pop %v1495
    %v1497 = vadd.f32 %v1496, 1.0
    %v1498 = vrcp.pop %v1497
    %v1499 = vmul.f32 1.0, %v1498
    %v1500 = vmul.f32 %v1499, 2.0
    %v1501 = vsub.f32 %v1500, 1.0
    %v1502 = vmul.f32 %v1499, %v1373
    %1504 = vrot.lane.b32.xlu0 %v1501, 64
    %v1505 = vpop.permute.xlu0 %1504
    %v1507 = vmul.f32 %v1499, %v1505
    %1509 = vrot.lane.b32.xlu0 %v1507, 32
    %v1510 = vpop.permute.xlu0 %1509
    %v1512 = vadd.f32 %v1502, %v1510
    %v1513 = vtanh.pop %v1512
    %1515 = vrot.lane.b32.xlu0 %v1513, 64
    %v1516 = vpop.permute.xlu0 %1515
    %v1518 = vmul.f32 %v1499, %v1516
    %v1521 = vunpack.c.l.s4 1966171168
    %v1522 = vunpack.c.0.s8 %v1521
    %v1523 = vlaneseq
    %v1524 = vshrl.u32 %v1523, 7
    %v1525 = vsub.s32 %v1522, %v1524
    %v1526 = vrot.slane %v1518, %v1525
    %v1527 = vcombine.high %v1526, %v1526
    %v1529 = vunpack.c.l.s4 1966171168
    %v1530 = vunpack.c.0.s8 %v1529
    %v1531 = vlaneseq
    %v1532 = vshrl.u32 %v1531, 7
    %v1533 = vsub.s32 %v1530, %v1532
    %v1534 = vrot.slane %v1526, %v1533
    %v1536 = vunpack.c.l.s4 1966171168
    %v1537 = vunpack.c.0.s8 %v1536
    %v1538 = vlaneseq
    %v1539 = vshrl.u32 %v1538, 7
    %v1540 = vsub.s32 %v1537, %v1539
    %v1541 = vrot.slane %v1527, %v1540
    %v1542 = vlaneseq
    %v1543 = vshrl.u32 %v1542, 7
    %v1544 = vsub.s32 0, %v1543
    %v1545 = vrot.slane %v1534, %v1544
    %v1546 = vlaneseq
    %v1547 = vshrl.u32 %v1546, 7
    %v1548 = vsub.s32 0, %v1547
    %v1549 = vrot.slane %v1541, %v1548
    %1550 = vrot.lane.b32.xlu0 %v1545, 32
    %v1551 = vpop.permute.xlu0 %1550
    %1552 = vrot.lane.b32.xlu0 %v1549, 32
    %v1553 = vpop.permute.xlu0 %1552
    %1556 = vst.msk [vmem:[#allocation2 + $0x1] sm:$0x1] %vm1417, %v1551
    %1557 = vst.msk [vmem:[#allocation2 + $0x9] sm:$0x1] %vm1417, %v1553
    %1558 = vrot.lane.b32.xlu0 %v1518, 32
    %v1559 = vpop.permute.xlu0 %1558
    %v1560 = vsel %vm148, %v1559, 0
    %1562 = vmatprep.subr.mxu0 0.0
    %1563 = vmatpush1.msra.mxu0 %v25
    %1564 = vmatprep.subr.mxu0 0.0
    %1565 = vmatpush1.msra.mxu0 %v28
    %1566 = vmatprep.subr.mxu0 0.0
    %1567 = vmatpush1.msra.mxu0 %v31
    %1568 = vmatprep.subr.mxu0 0.0
    %1569 = vmatpush1.msra.mxu0 %v34
    %1570 = vmatprep.subr.mxu0 0.0
    %1571 = vmatpush1.msra.mxu0 0.0
    %1572 = vmatprep.subr.mxu0 0.0
    %1573 = vmatpush1.msra.mxu0 0.0
    %1574 = vmatprep.subr.mxu0 0.0
    %1575 = vmatpush1.msra.mxu0 0.0
    %1576 = vmatprep.subr.mxu0 0.0
    %1577 = vmatpush1.msra.mxu0 0.0
    %1578 = vmatprep.subr.mxu0 0.0
    %1579 = vmatpush1.msra.mxu0 0.0
    %1580 = vmatprep.subr.mxu0 0.0
    %1581 = vmatpush1.msra.mxu0 0.0
    %1582 = vmatprep.subr.mxu0 0.0
    %1583 = vmatpush1.msra.mxu0 0.0
    %1584 = vmatprep.subr.mxu0 0.0
    %1585 = vmatpush1.msra.mxu0 0.0
    %1586 = vmatprep.subr.mxu0 0.0
    %1587 = vmatpush1.msra.mxu0 0.0
    %1588 = vmatprep.subr.mxu0 0.0
    %1589 = vmatpush1.msra.mxu0 0.0
    %1590 = vmatprep.subr.mxu0 0.0
    %1591 = vmatpush1.msra.mxu0 0.0
    %1592 = vmatprep.subr.mxu0 0.0
    %1593 = vmatpush1.msra.mxu0 0.0
    %1594 = vmatprep.subr.mxu0 0.0
    %1595 = vmatpush1.msra.mxu0 0.0
    %1596 = vmatprep.subr.mxu0 0.0
    %1597 = vmatpush1.msra.mxu0 0.0
    %1598 = vmatprep.subr.mxu0 0.0
    %1599 = vmatpush1.msra.mxu0 0.0
    %1600 = vmatprep.subr.mxu0 0.0
    %1601 = vmatpush1.msra.mxu0 0.0
    %1602 = vmatprep.subr.mxu0 0.0
    %1603 = vmatpush1.msra.mxu0 0.0
    %1604 = vmatprep.subr.mxu0 0.0
    %1605 = vmatpush1.msra.mxu0 0.0
    %1606 = vmatprep.subr.mxu0 0.0
    %1607 = vmatpush1.msra.mxu0 0.0
    %1608 = vmatprep.subr.mxu0 0.0
    %1609 = vmatpush1.msra.mxu0 0.0
    %1610 = vmatprep.subr.mxu0 0.0
    %1611 = vmatpush1.msra.mxu0 0.0
    %1612 = vmatprep.subr.mxu0 0.0
    %1613 = vmatpush1.msra.mxu0 0.0
    %1614 = vmatprep.subr.mxu0 0.0
    %1615 = vmatpush1.msra.mxu0 0.0
    %1616 = vmatprep.subr.mxu0 0.0
    %1617 = vmatpush1.msra.mxu0 0.0
    %1618 = vmatprep.subr.mxu0 0.0
    %1619 = vmatpush1.msra.mxu0 0.0
    %1620 = vmatprep.subr.mxu0 0.0
    %1621 = vmatpush1.msra.mxu0 0.0
    %1622 = vmatprep.subr.mxu0 0.0
    %1623 = vmatpush1.msra.mxu0 0.0
    %1624 = vmatprep.subr.mxu0 0.0
    %1625 = vmatpush1.msra.mxu0 0.0
    %1626 = vmatprep.mubr.f32.mxu0 0.0
    %1627 = vmatmul.mubr.f32.gmra.mrb[0].mxu0 %v1560
    %v1628 = vpop.f32.mrb[0].mxu0
    %v1629 = vadd.f32 %v43, %v1628
    %v1630 = vpop.f32.mrb[0].mxu0
    %1631 = vdwg.mxu0
    %v1632 = vxor.u32 %v1629, 2147483648
    %v1633 = vmul.f32 %v1632, 1.442695
    %v1634 = vpow.pop %v1633
    %v1635 = vadd.f32 %v1634, 1.0
    %v1636 = vrcp.pop %v1635
    %v1637 = vmul.f32 1.0, %v1636
    %v1638 = vmul.f32 %v1637, 2.0
    %v1639 = vsub.f32 %v1638, 1.0
    %v1640 = vmul.f32 %v1637, %v1512
    %1642 = vrot.lane.b32.xlu0 %v1639, 64
    %v1643 = vpop.permute.xlu0 %1642
    %v1645 = vmul.f32 %v1637, %v1643
    %1647 = vrot.lane.b32.xlu0 %v1645, 32
    %v1648 = vpop.permute.xlu0 %1647
    %v1650 = vadd.f32 %v1640, %v1648
    %v1651 = vtanh.pop %v1650
    %1653 = vrot.lane.b32.xlu0 %v1651, 64
    %v1654 = vpop.permute.xlu0 %1653
    %v1656 = vmul.f32 %v1637, %v1654
    %v1659 = vunpack.c.l.s4 1966171168
    %v1660 = vunpack.c.0.s8 %v1659
    %v1661 = vlaneseq
    %v1662 = vshrl.u32 %v1661, 7
    %v1663 = vsub.s32 %v1660, %v1662
    %v1664 = vrot.slane %v1656, %v1663
    %v1665 = vcombine.high %v1664, %v1664
    %v1667 = vunpack.c.l.s4 1966171168
    %v1668 = vunpack.c.0.s8 %v1667
    %v1669 = vlaneseq
    %v1670 = vshrl.u32 %v1669, 7
    %v1671 = vsub.s32 %v1668, %v1670
    %v1672 = vrot.slane %v1664, %v1671
    %v1674 = vunpack.c.l.s4 1966171168
    %v1675 = vunpack.c.0.s8 %v1674
    %v1676 = vlaneseq
    %v1677 = vshrl.u32 %v1676, 7
    %v1678 = vsub.s32 %v1675, %v1677
    %v1679 = vrot.slane %v1665, %v1678
    %v1680 = vlaneseq
    %v1681 = vshrl.u32 %v1680, 7
    %v1682 = vsub.s32 0, %v1681
    %v1683 = vrot.slane %v1672, %v1682
    %v1684 = vlaneseq
    %v1685 = vshrl.u32 %v1684, 7
    %v1686 = vsub.s32 0, %v1685
    %v1687 = vrot.slane %v1679, %v1686
    %1688 = vrot.lane.b32.xlu0 %v1683, 32
    %v1689 = vpop.permute.xlu0 %1688
    %1690 = vrot.lane.b32.xlu0 %v1687, 32
    %v1691 = vpop.permute.xlu0 %1690
    %1694 = vst.msk [vmem:[#allocation2 + $0x2] sm:$0x1] %vm1417, %v1689
    %1695 = vst.msk [vmem:[#allocation2 + $0xa] sm:$0x1] %vm1417, %v1691
    %1696 = vrot.lane.b32.xlu0 %v1656, 32
    %v1697 = vpop.permute.xlu0 %1696
    %v1698 = vsel %vm148, %v1697, 0
    %1700 = vmatprep.subr.mxu0 0.0
    %1701 = vmatpush1.msra.mxu0 %v25
    %1702 = vmatprep.subr.mxu0 0.0
    %1703 = vmatpush1.msra.mxu0 %v28
    %1704 = vmatprep.subr.mxu0 0.0
    %1705 = vmatpush1.msra.mxu0 %v31
    %1706 = vmatprep.subr.mxu0 0.0
    %1707 = vmatpush1.msra.mxu0 %v34
    %1708 = vmatprep.subr.mxu0 0.0
    %1709 = vmatpush1.msra.mxu0 0.0
    %1710 = vmatprep.subr.mxu0 0.0
    %1711 = vmatpush1.msra.mxu0 0.0
    %1712 = vmatprep.subr.mxu0 0.0
    %1713 = vmatpush1.msra.mxu0 0.0
    %1714 = vmatprep.subr.mxu0 0.0
    %1715 = vmatpush1.msra.mxu0 0.0
    %1716 = vmatprep.subr.mxu0 0.0
    %1717 = vmatpush1.msra.mxu0 0.0
    %1718 = vmatprep.subr.mxu0 0.0
    %1719 = vmatpush1.msra.mxu0 0.0
    %1720 = vmatprep.subr.mxu0 0.0
    %1721 = vmatpush1.msra.mxu0 0.0
    %1722 = vmatprep.subr.mxu0 0.0
    %1723 = vmatpush1.msra.mxu0 0.0
    %1724 = vmatprep.subr.mxu0 0.0
    %1725 = vmatpush1.msra.mxu0 0.0
    %1726 = vmatprep.subr.mxu0 0.0
    %1727 = vmatpush1.msra.mxu0 0.0
    %1728 = vmatprep.subr.mxu0 0.0
    %1729 = vmatpush1.msra.mxu0 0.0
    %1730 = vmatprep.subr.mxu0 0.0
    %1731 = vmatpush1.msra.mxu0 0.0
    %1732 = vmatprep.subr.mxu0 0.0
    %1733 = vmatpush1.msra.mxu0 0.0
    %1734 = vmatprep.subr.mxu0 0.0
    %1735 = vmatpush1.msra.mxu0 0.0
    %1736 = vmatprep.subr.mxu0 0.0
    %1737 = vmatpush1.msra.mxu0 0.0
    %1738 = vmatprep.subr.mxu0 0.0
    %1739 = vmatpush1.msra.mxu0 0.0
    %1740 = vmatprep.subr.mxu0 0.0
    %1741 = vmatpush1.msra.mxu0 0.0
    %1742 = vmatprep.subr.mxu0 0.0
    %1743 = vmatpush1.msra.mxu0 0.0
    %1744 = vmatprep.subr.mxu0 0.0
    %1745 = vmatpush1.msra.mxu0 0.0
    %1746 = vmatprep.subr.mxu0 0.0
    %1747 = vmatpush1.msra.mxu0 0.0
    %1748 = vmatprep.subr.mxu0 0.0
    %1749 = vmatpush1.msra.mxu0 0.0
    %1750 = vmatprep.subr.mxu0 0.0
    %1751 = vmatpush1.msra.mxu0 0.0
    %1752 = vmatprep.subr.mxu0 0.0
    %1753 = vmatpush1.msra.mxu0 0.0
    %1754 = vmatprep.subr.mxu0 0.0
    %1755 = vmatpush1.msra.mxu0 0.0
    %1756 = vmatprep.subr.mxu0 0.0
    %1757 = vmatpush1.msra.mxu0 0.0
    %1758 = vmatprep.subr.mxu0 0.0
    %1759 = vmatpush1.msra.mxu0 0.0
    %1760 = vmatprep.subr.mxu0 0.0
    %1761 = vmatpush1.msra.mxu0 0.0
    %1762 = vmatprep.subr.mxu0 0.0
    %1763 = vmatpush1.msra.mxu0 0.0
    %1764 = vmatprep.mubr.f32.mxu0 0.0
    %1765 = vmatmul.mubr.f32.gmra.mrb[0].mxu0 %v1698
    %v1766 = vpop.f32.mrb[0].mxu0
    %v1767 = vadd.f32 %v43, %v1766
    %v1768 = vpop.f32.mrb[0].mxu0
    %1769 = vdwg.mxu0
    %v1770 = vxor.u32 %v1767, 2147483648
    %v1771 = vmul.f32 %v1770, 1.442695
    %v1772 = vpow.pop %v1771
    %v1773 = vadd.f32 %v1772, 1.0
    %v1774 = vrcp.pop %v1773
    %v1775 = vmul.f32 1.0, %v1774
    %v1776 = vmul.f32 %v1775, 2.0
    %v1777 = vsub.f32 %v1776, 1.0
    %v1778 = vmul.f32 %v1775, %v1650
    %1780 = vrot.lane.b32.xlu0 %v1777, 64
    %v1781 = vpop.permute.xlu0 %1780
    %v1783 = vmul.f32 %v1775, %v1781
    %1785 = vrot.lane.b32.xlu0 %v1783, 32
    %v1786 = vpop.permute.xlu0 %1785
    %v1788 = vadd.f32 %v1778, %v1786
    %v1789 = vtanh.pop %v1788
    %1791 = vrot.lane.b32.xlu0 %v1789, 64
    %v1792 = vpop.permute.xlu0 %1791
    %v1794 = vmul.f32 %v1775, %v1792
    %v1797 = vunpack.c.l.s4 1966171168
    %v1798 = vunpack.c.0.s8 %v1797
    %v1799 = vlaneseq
    %v1800 = vshrl.u32 %v1799, 7
    %v1801 = vsub.s32 %v1798, %v1800
    %v1802 = vrot.slane %v1794, %v1801
    %v1803 = vcombine.high %v1802, %v1802
    %v1805 = vunpack.c.l.s4 1966171168
    %v1806 = vunpack.c.0.s8 %v1805
    %v1807 = vlaneseq
    %v1808 = vshrl.u32 %v1807, 7
    %v1809 = vsub.s32 %v1806, %v1808
    %v1810 = vrot.slane %v1802, %v1809
    %v1812 = vunpack.c.l.s4 1966171168
    %v1813 = vunpack.c.0.s8 %v1812
    %v1814 = vlaneseq
    %v1815 = vshrl.u32 %v1814, 7
    %v1816 = vsub.s32 %v1813, %v1815
    %v1817 = vrot.slane %v1803, %v1816
    %v1818 = vlaneseq
    %v1819 = vshrl.u32 %v1818, 7
    %v1820 = vsub.s32 0, %v1819
    %v1821 = vrot.slane %v1810, %v1820
    %v1822 = vlaneseq
    %v1823 = vshrl.u32 %v1822, 7
    %v1824 = vsub.s32 0, %v1823
    %v1825 = vrot.slane %v1817, %v1824
    %1826 = vrot.lane.b32.xlu0 %v1821, 32
    %v1827 = vpop.permute.xlu0 %1826
    %1828 = vrot.lane.b32.xlu0 %v1825, 32
    %v1829 = vpop.permute.xlu0 %1828
    %1832 = vst.msk [vmem:[#allocation2 + $0x3] sm:$0x1] %vm1417, %v1827
    %1833 = vst.msk [vmem:[#allocation2 + $0xb] sm:$0x1] %vm1417, %v1829
    %1834 = vrot.lane.b32.xlu0 %v1794, 32
    %v1835 = vpop.permute.xlu0 %1834
    %v1836 = vsel %vm148, %v1835, 0
    %1838 = vmatprep.subr.mxu0 0.0
    %1839 = vmatpush1.msra.mxu0 %v25
    %1840 = vmatprep.subr.mxu0 0.0
    %1841 = vmatpush1.msra.mxu0 %v28
    %1842 = vmatprep.subr.mxu0 0.0
    %1843 = vmatpush1.msra.mxu0 %v31
    %1844 = vmatprep.subr.mxu0 0.0
    %1845 = vmatpush1.msra.mxu0 %v34
    %1846 = vmatprep.subr.mxu0 0.0
    %1847 = vmatpush1.msra.mxu0 0.0
    %1848 = vmatprep.subr.mxu0 0.0
    %1849 = vmatpush1.msra.mxu0 0.0
    %1850 = vmatprep.subr.mxu0 0.0
    %1851 = vmatpush1.msra.mxu0 0.0
    %1852 = vmatprep.subr.mxu0 0.0
    %1853 = vmatpush1.msra.mxu0 0.0
    %1854 = vmatprep.subr.mxu0 0.0
    %1855 = vmatpush1.msra.mxu0 0.0
    %1856 = vmatprep.subr.mxu0 0.0
    %1857 = vmatpush1.msra.mxu0 0.0
    %1858 = vmatprep.subr.mxu0 0.0
    %1859 = vmatpush1.msra.mxu0 0.0
    %1860 = vmatprep.subr.mxu0 0.0
    %1861 = vmatpush1.msra.mxu0 0.0
    %1862 = vmatprep.subr.mxu0 0.0
    %1863 = vmatpush1.msra.mxu0 0.0
    %1864 = vmatprep.subr.mxu0 0.0
    %1865 = vmatpush1.msra.mxu0 0.0
    %1866 = vmatprep.subr.mxu0 0.0
    %1867 = vmatpush1.msra.mxu0 0.0
    %1868 = vmatprep.subr.mxu0 0.0
    %1869 = vmatpush1.msra.mxu0 0.0
    %1870 = vmatprep.subr.mxu0 0.0
    %1871 = vmatpush1.msra.mxu0 0.0
    %1872 = vmatprep.subr.mxu0 0.0
    %1873 = vmatpush1.msra.mxu0 0.0
    %1874 = vmatprep.subr.mxu0 0.0
    %1875 = vmatpush1.msra.mxu0 0.0
    %1876 = vmatprep.subr.mxu0 0.0
    %1877 = vmatpush1.msra.mxu0 0.0
    %1878 = vmatprep.subr.mxu0 0.0
    %1879 = vmatpush1.msra.mxu0 0.0
    %1880 = vmatprep.subr.mxu0 0.0
    %1881 = vmatpush1.msra.mxu0 0.0
    %1882 = vmatprep.subr.mxu0 0.0
    %1883 = vmatpush1.msra.mxu0 0.0
    %1884 = vmatprep.subr.mxu0 0.0
    %1885 = vmatpush1.msra.mxu0 0.0
    %1886 = vmatprep.subr.mxu0 0.0
    %1887 = vmatpush1.msra.mxu0 0.0
    %1888 = vmatprep.subr.mxu0 0.0
    %1889 = vmatpush1.msra.mxu0 0.0
    %1890 = vmatprep.subr.mxu0 0.0
    %1891 = vmatpush1.msra.mxu0 0.0
    %1892 = vmatprep.subr.mxu0 0.0
    %1893 = vmatpush1.msra.mxu0 0.0
    %1894 = vmatprep.subr.mxu0 0.0
    %1895 = vmatpush1.msra.mxu0 0.0
    %1896 = vmatprep.subr.mxu0 0.0
    %1897 = vmatpush1.msra.mxu0 0.0
    %1898 = vmatprep.subr.mxu0 0.0
    %1899 = vmatpush1.msra.mxu0 0.0
    %1900 = vmatprep.subr.mxu0 0.0
    %1901 = vmatpush1.msra.mxu0 0.0
    %1902 = vmatprep.mubr.f32.mxu0 0.0
    %1903 = vmatmul.mubr.f32.gmra.mrb[0].mxu0 %v1836
    %v1904 = vpop.f32.mrb[0].mxu0
    %v1905 = vadd.f32 %v43, %v1904
    %v1906 = vpop.f32.mrb[0].mxu0
    %1907 = vdwg.mxu0
    %v1908 = vxor.u32 %v1905, 2147483648
    %v1909 = vmul.f32 %v1908, 1.442695
    %v1910 = vpow.pop %v1909
    %v1911 = vadd.f32 %v1910, 1.0
    %v1912 = vrcp.pop %v1911
    %v1913 = vmul.f32 1.0, %v1912
    %v1914 = vmul.f32 %v1913, 2.0
    %v1915 = vsub.f32 %v1914, 1.0
    %v1916 = vmul.f32 %v1913, %v1788
    %1918 = vrot.lane.b32.xlu0 %v1915, 64
    %v1919 = vpop.permute.xlu0 %1918
    %v1921 = vmul.f32 %v1913, %v1919
    %1923 = vrot.lane.b32.xlu0 %v1921, 32
    %v1924 = vpop.permute.xlu0 %1923
    %v1926 = vadd.f32 %v1916, %v1924
    %v1927 = vtanh.pop %v1926
    %1929 = vrot.lane.b32.xlu0 %v1927, 64
    %v1930 = vpop.permute.xlu0 %1929
    %v1932 = vmul.f32 %v1913, %v1930
    %v1935 = vunpack.c.l.s4 1966171168
    %v1936 = vunpack.c.0.s8 %v1935
    %v1937 = vlaneseq
    %v1938 = vshrl.u32 %v1937, 7
    %v1939 = vsub.s32 %v1936, %v1938
    %v1940 = vrot.slane %v1932, %v1939
    %v1941 = vcombine.high %v1940, %v1940
    %v1943 = vunpack.c.l.s4 1966171168
    %v1944 = vunpack.c.0.s8 %v1943
    %v1945 = vlaneseq
    %v1946 = vshrl.u32 %v1945, 7
    %v1947 = vsub.s32 %v1944, %v1946
    %v1948 = vrot.slane %v1940, %v1947
    %v1950 = vunpack.c.l.s4 1966171168
    %v1951 = vunpack.c.0.s8 %v1950
    %v1952 = vlaneseq
    %v1953 = vshrl.u32 %v1952, 7
    %v1954 = vsub.s32 %v1951, %v1953
    %v1955 = vrot.slane %v1941, %v1954
    %v1956 = vlaneseq
    %v1957 = vshrl.u32 %v1956, 7
    %v1958 = vsub.s32 0, %v1957
    %v1959 = vrot.slane %v1948, %v1958
    %v1960 = vlaneseq
    %v1961 = vshrl.u32 %v1960, 7
    %v1962 = vsub.s32 0, %v1961
    %v1963 = vrot.slane %v1955, %v1962
    %1964 = vrot.lane.b32.xlu0 %v1959, 32
    %v1965 = vpop.permute.xlu0 %1964
    %1966 = vrot.lane.b32.xlu0 %v1963, 32
    %v1967 = vpop.permute.xlu0 %1966
    %1970 = vst.msk [vmem:[#allocation2 + $0x4] sm:$0x1] %vm1417, %v1965
    %1971 = vst.msk [vmem:[#allocation2 + $0xc] sm:$0x1] %vm1417, %v1967
    %1972 = vrot.lane.b32.xlu0 %v1932, 32
    %v1973 = vpop.permute.xlu0 %1972
    %v1974 = vsel %vm148, %v1973, 0
    %1976 = vmatprep.subr.mxu0 0.0
    %1977 = vmatpush1.msra.mxu0 %v25
    %1978 = vmatprep.subr.mxu0 0.0
    %1979 = vmatpush1.msra.mxu0 %v28
    %1980 = vmatprep.subr.mxu0 0.0
    %1981 = vmatpush1.msra.mxu0 %v31
    %1982 = vmatprep.subr.mxu0 0.0
    %1983 = vmatpush1.msra.mxu0 %v34
    %1984 = vmatprep.subr.mxu0 0.0
    %1985 = vmatpush1.msra.mxu0 0.0
    %1986 = vmatprep.subr.mxu0 0.0
    %1987 = vmatpush1.msra.mxu0 0.0
    %1988 = vmatprep.subr.mxu0 0.0
    %1989 = vmatpush1.msra.mxu0 0.0
    %1990 = vmatprep.subr.mxu0 0.0
    %1991 = vmatpush1.msra.mxu0 0.0
    %1992 = vmatprep.subr.mxu0 0.0
    %1993 = vmatpush1.msra.mxu0 0.0
    %1994 = vmatprep.subr.mxu0 0.0
    %1995 = vmatpush1.msra.mxu0 0.0
    %1996 = vmatprep.subr.mxu0 0.0
    %1997 = vmatpush1.msra.mxu0 0.0
    %1998 = vmatprep.subr.mxu0 0.0
    %1999 = vmatpush1.msra.mxu0 0.0
    %2000 = vmatprep.subr.mxu0 0.0
    %2001 = vmatpush1.msra.mxu0 0.0
    %2002 = vmatprep.subr.mxu0 0.0
    %2003 = vmatpush1.msra.mxu0 0.0
    %2004 = vmatprep.subr.mxu0 0.0
    %2005 = vmatpush1.msra.mxu0 0.0
    %2006 = vmatprep.subr.mxu0 0.0
    %2007 = vmatpush1.msra.mxu0 0.0
    %2008 = vmatprep.subr.mxu0 0.0
    %2009 = vmatpush1.msra.mxu0 0.0
    %2010 = vmatprep.subr.mxu0 0.0
    %2011 = vmatpush1.msra.mxu0 0.0
    %2012 = vmatprep.subr.mxu0 0.0
    %2013 = vmatpush1.msra.mxu0 0.0
    %2014 = vmatprep.subr.mxu0 0.0
    %2015 = vmatpush1.msra.mxu0 0.0
    %2016 = vmatprep.subr.mxu0 0.0
    %2017 = vmatpush1.msra.mxu0 0.0
    %2018 = vmatprep.subr.mxu0 0.0
    %2019 = vmatpush1.msra.mxu0 0.0
    %2020 = vmatprep.subr.mxu0 0.0
    %2021 = vmatpush1.msra.mxu0 0.0
    %2022 = vmatprep.subr.mxu0 0.0
    %2023 = vmatpush1.msra.mxu0 0.0
    %2024 = vmatprep.subr.mxu0 0.0
    %2025 = vmatpush1.msra.mxu0 0.0
    %2026 = vmatprep.subr.mxu0 0.0
    %2027 = vmatpush1.msra.mxu0 0.0
    %2028 = vmatprep.subr.mxu0 0.0
    %2029 = vmatpush1.msra.mxu0 0.0
    %2030 = vmatprep.subr.mxu0 0.0
    %2031 = vmatpush1.msra.mxu0 0.0
    %2032 = vmatprep.subr.mxu0 0.0
    %2033 = vmatpush1.msra.mxu0 0.0
    %2034 = vmatprep.subr.mxu0 0.0
    %2035 = vmatpush1.msra.mxu0 0.0
    %2036 = vmatprep.subr.mxu0 0.0
    %2037 = vmatpush1.msra.mxu0 0.0
    %2038 = vmatprep.subr.mxu0 0.0
    %2039 = vmatpush1.msra.mxu0 0.0
    %2040 = vmatprep.mubr.f32.mxu0 0.0
    %2041 = vmatmul.mubr.f32.gmra.mrb[0].mxu0 %v1974
    %v2042 = vpop.f32.mrb[0].mxu0
    %v2043 = vadd.f32 %v43, %v2042
    %v2044 = vpop.f32.mrb[0].mxu0
    %2045 = vdwg.mxu0
    %v2046 = vxor.u32 %v2043, 2147483648
    %v2047 = vmul.f32 %v2046, 1.442695
    %v2048 = vpow.pop %v2047
    %v2049 = vadd.f32 %v2048, 1.0
    %v2050 = vrcp.pop %v2049
    %v2051 = vmul.f32 1.0, %v2050
    %v2052 = vmul.f32 %v2051, 2.0
    %v2053 = vsub.f32 %v2052, 1.0
    %v2054 = vmul.f32 %v2051, %v1926
    %2056 = vrot.lane.b32.xlu0 %v2053, 64
    %v2057 = vpop.permute.xlu0 %2056
    %v2059 = vmul.f32 %v2051, %v2057
    %2061 = vrot.lane.b32.xlu0 %v2059, 32
    %v2062 = vpop.permute.xlu0 %2061
    %v2064 = vadd.f32 %v2054, %v2062
    %v2065 = vtanh.pop %v2064
    %2067 = vrot.lane.b32.xlu0 %v2065, 64
    %v2068 = vpop.permute.xlu0 %2067
    %v2070 = vmul.f32 %v2051, %v2068
    %v2073 = vunpack.c.l.s4 1966171168
    %v2074 = vunpack.c.0.s8 %v2073
    %v2075 = vlaneseq
    %v2076 = vshrl.u32 %v2075, 7
    %v2077 = vsub.s32 %v2074, %v2076
    %v2078 = vrot.slane %v2070, %v2077
    %v2079 = vcombine.high %v2078, %v2078
    %v2081 = vunpack.c.l.s4 1966171168
    %v2082 = vunpack.c.0.s8 %v2081
    %v2083 = vlaneseq
    %v2084 = vshrl.u32 %v2083, 7
    %v2085 = vsub.s32 %v2082, %v2084
    %v2086 = vrot.slane %v2078, %v2085
    %v2088 = vunpack.c.l.s4 1966171168
    %v2089 = vunpack.c.0.s8 %v2088
    %v2090 = vlaneseq
    %v2091 = vshrl.u32 %v2090, 7
    %v2092 = vsub.s32 %v2089, %v2091
    %v2093 = vrot.slane %v2079, %v2092
    %v2094 = vlaneseq
    %v2095 = vshrl.u32 %v2094, 7
    %v2096 = vsub.s32 0, %v2095
    %v2097 = vrot.slane %v2086, %v2096
    %v2098 = vlaneseq
    %v2099 = vshrl.u32 %v2098, 7
    %v2100 = vsub.s32 0, %v2099
    %v2101 = vrot.slane %v2093, %v2100
    %2102 = vrot.lane.b32.xlu0 %v2097, 32
    %v2103 = vpop.permute.xlu0 %2102
    %2104 = vrot.lane.b32.xlu0 %v2101, 32
    %v2105 = vpop.permute.xlu0 %2104
    %2108 = vst.msk [vmem:[#allocation2 + $0x5] sm:$0x1] %vm1417, %v2103
    %2109 = vst.msk [vmem:[#allocation2 + $0xd] sm:$0x1] %vm1417, %v2105
    %2110 = vrot.lane.b32.xlu0 %v2070, 32
    %v2111 = vpop.permute.xlu0 %2110
    %v2112 = vsel %vm148, %v2111, 0
    %2114 = vmatprep.subr.mxu0 0.0
    %2115 = vmatpush1.msra.mxu0 %v25
    %2116 = vmatprep.subr.mxu0 0.0
    %2117 = vmatpush1.msra.mxu0 %v28
    %2118 = vmatprep.subr.mxu0 0.0
    %2119 = vmatpush1.msra.mxu0 %v31
    %2120 = vmatprep.subr.mxu0 0.0
    %2121 = vmatpush1.msra.mxu0 %v34
    %2122 = vmatprep.subr.mxu0 0.0
    %2123 = vmatpush1.msra.mxu0 0.0
    %2124 = vmatprep.subr.mxu0 0.0
    %2125 = vmatpush1.msra.mxu0 0.0
    %2126 = vmatprep.subr.mxu0 0.0
    %2127 = vmatpush1.msra.mxu0 0.0
    %2128 = vmatprep.subr.mxu0 0.0
    %2129 = vmatpush1.msra.mxu0 0.0
    %2130 = vmatprep.subr.mxu0 0.0
    %2131 = vmatpush1.msra.mxu0 0.0
    %2132 = vmatprep.subr.mxu0 0.0
    %2133 = vmatpush1.msra.mxu0 0.0
    %2134 = vmatprep.subr.mxu0 0.0
    %2135 = vmatpush1.msra.mxu0 0.0
    %2136 = vmatprep.subr.mxu0 0.0
    %2137 = vmatpush1.msra.mxu0 0.0
    %2138 = vmatprep.subr.mxu0 0.0
    %2139 = vmatpush1.msra.mxu0 0.0
    %2140 = vmatprep.subr.mxu0 0.0
    %2141 = vmatpush1.msra.mxu0 0.0
    %2142 = vmatprep.subr.mxu0 0.0
    %2143 = vmatpush1.msra.mxu0 0.0
    %2144 = vmatprep.subr.mxu0 0.0
    %2145 = vmatpush1.msra.mxu0 0.0
    %2146 = vmatprep.subr.mxu0 0.0
    %2147 = vmatpush1.msra.mxu0 0.0
    %2148 = vmatprep.subr.mxu0 0.0
    %2149 = vmatpush1.msra.mxu0 0.0
    %2150 = vmatprep.subr.mxu0 0.0
    %2151 = vmatpush1.msra.mxu0 0.0
    %2152 = vmatprep.subr.mxu0 0.0
    %2153 = vmatpush1.msra.mxu0 0.0
    %2154 = vmatprep.subr.mxu0 0.0
    %2155 = vmatpush1.msra.mxu0 0.0
    %2156 = vmatprep.subr.mxu0 0.0
    %2157 = vmatpush1.msra.mxu0 0.0
    %2158 = vmatprep.subr.mxu0 0.0
    %2159 = vmatpush1.msra.mxu0 0.0
    %2160 = vmatprep.subr.mxu0 0.0
    %2161 = vmatpush1.msra.mxu0 0.0
    %2162 = vmatprep.subr.mxu0 0.0
    %2163 = vmatpush1.msra.mxu0 0.0
    %2164 = vmatprep.subr.mxu0 0.0
    %2165 = vmatpush1.msra.mxu0 0.0
    %2166 = vmatprep.subr.mxu0 0.0
    %2167 = vmatpush1.msra.mxu0 0.0
    %2168 = vmatprep.subr.mxu0 0.0
    %2169 = vmatpush1.msra.mxu0 0.0
    %2170 = vmatprep.subr.mxu0 0.0
    %2171 = vmatpush1.msra.mxu0 0.0
    %2172 = vmatprep.subr.mxu0 0.0
    %2173 = vmatpush1.msra.mxu0 0.0
    %2174 = vmatprep.subr.mxu0 0.0
    %2175 = vmatpush1.msra.mxu0 0.0
    %2176 = vmatprep.subr.mxu0 0.0
    %2177 = vmatpush1.msra.mxu0 0.0
    %2178 = vmatprep.mubr.f32.mxu0 0.0
    %2179 = vmatmul.mubr.f32.gmra.mrb[0].mxu0 %v2112
    %v2180 = vpop.f32.mrb[0].mxu0
    %v2181 = vadd.f32 %v43, %v2180
    %v2182 = vpop.f32.mrb[0].mxu0
    %2183 = vdwg.mxu0
    %v2184 = vxor.u32 %v2181, 2147483648
    %v2185 = vmul.f32 %v2184, 1.442695
    %v2186 = vpow.pop %v2185
    %v2187 = vadd.f32 %v2186, 1.0
    %v2188 = vrcp.pop %v2187
    %v2189 = vmul.f32 1.0, %v2188
    %v2190 = vmul.f32 %v2189, 2.0
    %v2191 = vsub.f32 %v2190, 1.0
    %v2192 = vmul.f32 %v2189, %v2064
    %2194 = vrot.lane.b32.xlu0 %v2191, 64
    %v2195 = vpop.permute.xlu0 %2194
    %v2197 = vmul.f32 %v2189, %v2195
    %2199 = vrot.lane.b32.xlu0 %v2197, 32
    %v2200 = vpop.permute.xlu0 %2199
    %v2202 = vadd.f32 %v2192, %v2200
    %v2203 = vtanh.pop %v2202
    %2205 = vrot.lane.b32.xlu0 %v2203, 64
    %v2206 = vpop.permute.xlu0 %2205
    %v2208 = vmul.f32 %v2189, %v2206
    %v2211 = vunpack.c.l.s4 1966171168
    %v2212 = vunpack.c.0.s8 %v2211
    %v2213 = vlaneseq
    %v2214 = vshrl.u32 %v2213, 7
    %v2215 = vsub.s32 %v2212, %v2214
    %v2216 = vrot.slane %v2208, %v2215
    %v2217 = vcombine.high %v2216, %v2216
    %v2219 = vunpack.c.l.s4 1966171168
    %v2220 = vunpack.c.0.s8 %v2219
    %v2221 = vlaneseq
    %v2222 = vshrl.u32 %v2221, 7
    %v2223 = vsub.s32 %v2220, %v2222
    %v2224 = vrot.slane %v2216, %v2223
    %v2226 = vunpack.c.l.s4 1966171168
    %v2227 = vunpack.c.0.s8 %v2226
    %v2228 = vlaneseq
    %v2229 = vshrl.u32 %v2228, 7
    %v2230 = vsub.s32 %v2227, %v2229
    %v2231 = vrot.slane %v2217, %v2230
    %v2232 = vlaneseq
    %v2233 = vshrl.u32 %v2232, 7
    %v2234 = vsub.s32 0, %v2233
    %v2235 = vrot.slane %v2224, %v2234
    %v2236 = vlaneseq
    %v2237 = vshrl.u32 %v2236, 7
    %v2238 = vsub.s32 0, %v2237
    %v2239 = vrot.slane %v2231, %v2238
    %2240 = vrot.lane.b32.xlu0 %v2235, 32
    %v2241 = vpop.permute.xlu0 %2240
    %2242 = vrot.lane.b32.xlu0 %v2239, 32
    %v2243 = vpop.permute.xlu0 %2242
    %2246 = vst.msk [vmem:[#allocation2 + $0x6] sm:$0x1] %vm1417, %v2241
    %2247 = vst.msk [vmem:[#allocation2 + $0xe] sm:$0x1] %vm1417, %v2243
    %2248 = vrot.lane.b32.xlu0 %v2208, 32
    %v2249 = vpop.permute.xlu0 %2248
    %v2250 = vsel %vm148, %v2249, 0
    %2252 = vmatprep.subr.mxu0 0.0
    %2253 = vmatpush1.msra.mxu0 %v25
    %2254 = vmatprep.subr.mxu0 0.0
    %2255 = vmatpush1.msra.mxu0 %v28
    %2256 = vmatprep.subr.mxu0 0.0
    %2257 = vmatpush1.msra.mxu0 %v31
    %2258 = vmatprep.subr.mxu0 0.0
    %2259 = vmatpush1.msra.mxu0 %v34
    %2260 = vmatprep.subr.mxu0 0.0
    %2261 = vmatpush1.msra.mxu0 0.0
    %2262 = vmatprep.subr.mxu0 0.0
    %2263 = vmatpush1.msra.mxu0 0.0
    %2264 = vmatprep.subr.mxu0 0.0
    %2265 = vmatpush1.msra.mxu0 0.0
    %2266 = vmatprep.subr.mxu0 0.0
    %2267 = vmatpush1.msra.mxu0 0.0
    %2268 = vmatprep.subr.mxu0 0.0
    %2269 = vmatpush1.msra.mxu0 0.0
    %2270 = vmatprep.subr.mxu0 0.0
    %2271 = vmatpush1.msra.mxu0 0.0
    %2272 = vmatprep.subr.mxu0 0.0
    %2273 = vmatpush1.msra.mxu0 0.0
    %2274 = vmatprep.subr.mxu0 0.0
    %2275 = vmatpush1.msra.mxu0 0.0
    %2276 = vmatprep.subr.mxu0 0.0
    %2277 = vmatpush1.msra.mxu0 0.0
    %2278 = vmatprep.subr.mxu0 0.0
    %2279 = vmatpush1.msra.mxu0 0.0
    %2280 = vmatprep.subr.mxu0 0.0
    %2281 = vmatpush1.msra.mxu0 0.0
    %2282 = vmatprep.subr.mxu0 0.0
    %2283 = vmatpush1.msra.mxu0 0.0
    %2284 = vmatprep.subr.mxu0 0.0
    %2285 = vmatpush1.msra.mxu0 0.0
    %2286 = vmatprep.subr.mxu0 0.0
    %2287 = vmatpush1.msra.mxu0 0.0
    %2288 = vmatprep.subr.mxu0 0.0
    %2289 = vmatpush1.msra.mxu0 0.0
    %2290 = vmatprep.subr.mxu0 0.0
    %2291 = vmatpush1.msra.mxu0 0.0
    %2292 = vmatprep.subr.mxu0 0.0
    %2293 = vmatpush1.msra.mxu0 0.0
    %2294 = vmatprep.subr.mxu0 0.0
    %2295 = vmatpush1.msra.mxu0 0.0
    %2296 = vmatprep.subr.mxu0 0.0
    %2297 = vmatpush1.msra.mxu0 0.0
    %2298 = vmatprep.subr.mxu0 0.0
    %2299 = vmatpush1.msra.mxu0 0.0
    %2300 = vmatprep.subr.mxu0 0.0
    %2301 = vmatpush1.msra.mxu0 0.0
    %2302 = vmatprep.subr.mxu0 0.0
    %2303 = vmatpush1.msra.mxu0 0.0
    %2304 = vmatprep.subr.mxu0 0.0
    %2305 = vmatpush1.msra.mxu0 0.0
    %2306 = vmatprep.subr.mxu0 0.0
    %2307 = vmatpush1.msra.mxu0 0.0
    %2308 = vmatprep.subr.mxu0 0.0
    %2309 = vmatpush1.msra.mxu0 0.0
    %2310 = vmatprep.subr.mxu0 0.0
    %2311 = vmatpush1.msra.mxu0 0.0
    %2312 = vmatprep.subr.mxu0 0.0
    %2313 = vmatpush1.msra.mxu0 0.0
    %2314 = vmatprep.subr.mxu0 0.0
    %2315 = vmatpush1.msra.mxu0 0.0
    %2316 = vmatprep.mubr.f32.mxu0 0.0
    %2317 = vmatmul.mubr.f32.gmra.mrb[0].mxu0 %v2250
    %v2318 = vpop.f32.mrb[0].mxu0
    %v2319 = vadd.f32 %v43, %v2318
    %v2320 = vpop.f32.mrb[0].mxu0
    %2321 = vdwg.mxu0
    %v2322 = vxor.u32 %v2319, 2147483648
    %v2323 = vmul.f32 %v2322, 1.442695
    %v2324 = vpow.pop %v2323
    %v2325 = vadd.f32 %v2324, 1.0
    %v2326 = vrcp.pop %v2325
    %v2327 = vmul.f32 1.0, %v2326
    %v2328 = vmul.f32 %v2327, 2.0
    %v2329 = vsub.f32 %v2328, 1.0
    %v2330 = vmul.f32 %v2327, %v2202
    %2332 = vrot.lane.b32.xlu0 %v2329, 64
    %v2333 = vpop.permute.xlu0 %2332
    %v2335 = vmul.f32 %v2327, %v2333
    %2337 = vrot.lane.b32.xlu0 %v2335, 32
    %v2338 = vpop.permute.xlu0 %2337
    %v2340 = vadd.f32 %v2330, %v2338
    %v2341 = vtanh.pop %v2340
    %2343 = vrot.lane.b32.xlu0 %v2341, 64
    %v2344 = vpop.permute.xlu0 %2343
    %v2346 = vmul.f32 %v2327, %v2344
    %v2349 = vunpack.c.l.s4 1966171168
    %v2350 = vunpack.c.0.s8 %v2349
    %v2351 = vlaneseq
    %v2352 = vshrl.u32 %v2351, 7
    %v2353 = vsub.s32 %v2350, %v2352
    %v2354 = vrot.slane %v2346, %v2353
    %v2355 = vcombine.high %v2354, %v2354
    %v2357 = vunpack.c.l.s4 1966171168
    %v2358 = vunpack.c.0.s8 %v2357
    %v2359 = vlaneseq
    %v2360 = vshrl.u32 %v2359, 7
    %v2361 = vsub.s32 %v2358, %v2360
    %v2362 = vrot.slane %v2354, %v2361
    %v2364 = vunpack.c.l.s4 1966171168
    %v2365 = vunpack.c.0.s8 %v2364
    %v2366 = vlaneseq
    %v2367 = vshrl.u32 %v2366, 7
    %v2368 = vsub.s32 %v2365, %v2367
    %v2369 = vrot.slane %v2355, %v2368
    %v2370 = vlaneseq
    %v2371 = vshrl.u32 %v2370, 7
    %v2372 = vsub.s32 0, %v2371
    %v2373 = vrot.slane %v2362, %v2372
    %v2374 = vlaneseq
    %v2375 = vshrl.u32 %v2374, 7
    %v2376 = vsub.s32 0, %v2375
    %v2377 = vrot.slane %v2369, %v2376
    %2378 = vrot.lane.b32.xlu0 %v2373, 32
    %v2379 = vpop.permute.xlu0 %2378
    %2380 = vrot.lane.b32.xlu0 %v2377, 32
    %v2381 = vpop.permute.xlu0 %2380
    %2384 = vst.msk [vmem:[#allocation2 + $0x7] sm:$0x1] %vm1417, %v2379
    %2385 = vst.msk [vmem:[#allocation2 + $0xf] sm:$0x1] %vm1417, %v2381
    %v2386 = vld [vmem:[#allocation2] sm:$0xff]
    %v2387 = vld [vmem:[#allocation2 + $0x8] sm:$0xff]
    %v2388 = vlaneseq
    %v2389 = vshrl.u32 %v2388, 7
    %v2390 = vsub.s32 3, %v2389
    %v2391 = vrot.slane %v35, %v2390
    %v2393 = vsel %vm148, %v2386, 0
    %v2396 = vsel %vm148, %v2387, 0
    %2398 = vmatprep.subr.mxu0 0.0
    %2399 = vmatpush1.msra.mxu0 %v44
    %2400 = vmatprep.subr.mxu0 0.0
    %2401 = vmatpush1.msra.mxu0 %v45
    %2402 = vmatprep.subr.mxu0 0.0
    %2403 = vmatpush1.msra.mxu0 %v46
    %2404 = vmatprep.subr.mxu0 0.0
    %2405 = vmatpush1.msra.mxu0 %v47
    %2406 = vmatprep.subr.mxu0 0.0
    %2407 = vmatpush1.msra.mxu0 0.0
    %2408 = vmatprep.subr.mxu0 0.0
    %2409 = vmatpush1.msra.mxu0 0.0
    %2410 = vmatprep.subr.mxu0 0.0
    %2411 = vmatpush1.msra.mxu0 0.0
    %2412 = vmatprep.subr.mxu0 0.0
    %2413 = vmatpush1.msra.mxu0 0.0
    %2414 = vmatprep.subr.mxu0 0.0
    %2415 = vmatpush1.msra.mxu0 0.0
    %2416 = vmatprep.subr.mxu0 0.0
    %2417 = vmatpush1.msra.mxu0 0.0
    %2418 = vmatprep.subr.mxu0 0.0
    %2419 = vmatpush1.msra.mxu0 0.0
    %2420 = vmatprep.subr.mxu0 0.0
    %2421 = vmatpush1.msra.mxu0 0.0
    %2422 = vmatprep.subr.mxu0 0.0
    %2423 = vmatpush1.msra.mxu0 0.0
    %2424 = vmatprep.subr.mxu0 0.0
    %2425 = vmatpush1.msra.mxu0 0.0
    %2426 = vmatprep.subr.mxu0 0.0
    %2427 = vmatpush1.msra.mxu0 0.0
    %2428 = vmatprep.subr.mxu0 0.0
    %2429 = vmatpush1.msra.mxu0 0.0
    %2430 = vmatprep.subr.mxu0 0.0
    %2431 = vmatpush1.msra.mxu0 0.0
    %2432 = vmatprep.subr.mxu0 0.0
    %2433 = vmatpush1.msra.mxu0 0.0
    %2434 = vmatprep.subr.mxu0 0.0
    %2435 = vmatpush1.msra.mxu0 0.0
    %2436 = vmatprep.subr.mxu0 0.0
    %2437 = vmatpush1.msra.mxu0 0.0
    %2438 = vmatprep.subr.mxu0 0.0
    %2439 = vmatpush1.msra.mxu0 0.0
    %2440 = vmatprep.subr.mxu0 0.0
    %2441 = vmatpush1.msra.mxu0 0.0
    %2442 = vmatprep.subr.mxu0 0.0
    %2443 = vmatpush1.msra.mxu0 0.0
    %2444 = vmatprep.subr.mxu0 0.0
    %2445 = vmatpush1.msra.mxu0 0.0
    %2446 = vmatprep.subr.mxu0 0.0
    %2447 = vmatpush1.msra.mxu0 0.0
    %2448 = vmatprep.subr.mxu0 0.0
    %2449 = vmatpush1.msra.mxu0 0.0
    %2450 = vmatprep.subr.mxu0 0.0
    %2451 = vmatpush1.msra.mxu0 0.0
    %2452 = vmatprep.subr.mxu0 0.0
    %2453 = vmatpush1.msra.mxu0 0.0
    %2454 = vmatprep.subr.mxu0 0.0
    %2455 = vmatpush1.msra.mxu0 0.0
    %2456 = vmatprep.subr.mxu0 0.0
    %2457 = vmatpush1.msra.mxu0 0.0
    %2458 = vmatprep.subr.mxu0 0.0
    %2459 = vmatpush1.msra.mxu0 0.0
    %2460 = vmatprep.subr.mxu0 0.0
    %2461 = vmatpush1.msra.mxu0 0.0
    %2462 = vmatprep.mubr.f32.mxu0 0.0
    %2463 = vmatmul.mubr.f32.gmra.mrb[0].mxu0 %v2393
    %v2464 = vpop.f32.mrb[0].mxu0
    %v2465 = vadd.f32 %v2391, %v2464
    %v2466 = vpop.f32.mrb[0].mxu0
    %2467 = vmatprep.mubr.f32.mxu0 0.0
    %2468 = vmatmul.mubr.f32.gmra.mrb[0].mxu0 %v2396
    %v2469 = vpop.f32.mrb[0].mxu0
    %v2470 = vadd.f32 %v2391, %v2469
    %v2471 = vpop.f32.mrb[0].mxu0
    %2472 = vdwg.mxu0
    %2473 = vst.msk [vmem:[#allocation3] sm:$0xff] %vm62, %v2465
    %2474 = vst.msk [vmem:[#allocation3 + $0x8] sm:$0xff] %vm62, %v2470
    // Predicated region
    $region22: #{lstm_body_ae_forward.1} parent=1 // pred_check
      _
    $region23: #{lstm_body_ae_forward.1} parent=1 // pred_check_branch
      %2476 = sbr.rel (0) target = $region25
    $region24: #{lstm_body_ae_forward.1} parent=1 // pred_region
      %s2478 = ssub.s32 256, 256
      %2479 = vsyncadd [#allocation4], %s2478
      %s2480 = sshll.u32 [#allocation3], 4
      %s2481 = int_to_ptr.vmem [resolvable:$true] %s2480
      %2486 = dma.vmem_to_hbm [thread:$0]  %s2481, 256, %s5, [#allocation4], 128, 128, 8
    $region25: #{lstm_body_ae_forward.1} parent=1 // pred_fallthru
      _
    // Predicated region
    $region26: #{lstm_body_ae_forward.1} parent=1 // pred_check
      _
    $region27: #{lstm_body_ae_forward.1} parent=1 // pred_check_branch
      %2488 = sbr.rel (0) target = $region29
    $region28: #{lstm_body_ae_forward.1} parent=1 // pred_region
      %2489 = dma.done [#allocation4], 256
    $region29: #{lstm_body_ae_forward.1} parent=1 // pred_fallthru
      _
    %2490 = vsyncpa [#allocation4], 1

</llo_original>
